<compile_context>
chip_gen: v7x
topology: tpu7x:2x2x1
jax: 0.10.0
libtpu: 0.0.40
codegen_flags: <defaults>
</compile_context>

<pallas_src>
import numpy as np

import jax
import jax.numpy as jnp
from jax.experimental import pallas as pl
from jax.experimental.pallas import tpu as pltpu

_EPS = 1e-5

# DARTS operations.py OPS key order (list(OPS.keys())) assumed by this script.
OPS_KEYS = [
    "none",
    "avg_pool_3x3",
    "max_pool_3x3",
    "skip_connect",
    "sep_conv_3x3",
    "sep_conv_5x5",
    "dil_conv_3x3",
    "dil_conv_5x5",
]

_NEG_BIG = 1e30  # max-pool "padding" value (never wins: the center tap is always valid)


def _collect_offsets(plan):
    """All (oh, ow) spatial offsets (except the center) the chosen edge ops will use."""
    offs = set()

    def add(K, dil):
        pad = dil * (K // 2)
        for i in range(K):
            for j in range(K):
                oh, ow = i * dil - pad, j * dil - pad
                if (oh, ow) != (0, 0):
                    offs.add((oh, ow))

    for node in plan:
        for _, op in node:
            kind = op[0]
            if kind in ("max_pool", "avg_pool"):
                add(3, 1)
            elif kind == "sep":
                add(op[1], 1)
            elif kind == "dil":
                add(op[1], 2)
    return sorted(offs)


# ----------------------------------------------------------------------------
# Fused whole-cell kernel builder.
#
# Kernel inputs  : s0 (N*C_pp, H*W), s1 (N*C_p, H*W)   -- NCHW flattened (free reshape)
#                  aux (1 + n_offsets, M) f32          -- row 0: 1/avg-pool divisor,
#                                                         rows 1..: (oh,ow) validity masks
#                  wpack (C, n_slots*128) f32          -- all conv weights, 128-lane bands
# Kernel output  : (N * multiplier*C, H*W)             -- NCHW flattened, lane-dense
# Internal state : (C, M) with M = N*H*W (lane axis = 512 -> 4 full vregs / row)
# ----------------------------------------------------------------------------
def _build_cell_kernel(plan, multiplier, C, N, H, W, off2row, slot_cols):
    HW = H * W
    M = N * HW

    def kernel(s0_ref, s1_ref, aux_ref, w_ref, out_ref):
        inv_cnt = aux_ref[0:1, :]                         # (1, M) avg-pool reciprocal

        # --- precomputed validity masks (host-built, one static row slice each) ---
        maskf_cache = {}

        def maskf(oh, ow):                                # (1, M) f32
            key = (oh, ow)
            if key not in maskf_cache:
                r = off2row[key]
                maskf_cache[key] = aux_ref[r:r + 1, :]
            return maskf_cache[key]

        maskb_cache = {}

        def maskb(oh, ow):                                # (1, M) bool
            key = (oh, ow)
            if key not in maskb_cache:
                maskb_cache[key] = maskf(oh, ow) > 0.5
            return maskb_cache[key]

        # --- packed weight slab: slot i lives in lanes [i*128, i*128 + cols_i) ---
        def getw(idx):                                    # -> (C, cols_idx)
            c0 = idx * 128
            return w_ref[:, c0:c0 + slot_cols[idx]]

        # --- circular lane shift; wrapped lanes are always killed by the mask ---
        def roll(x, delta):                               # z[:, s] = x[:, (s+delta) % M]
            if delta == 0:
                return x
            return pltpu.roll(x, shift=(-delta) % M, axis=1)

        # --- BatchNorm2d(affine=False), training batch stats, biased variance ---
        def bn(y):                                        # y: (C, M)
            inv_m = jnp.float32(1.0 / M)
            s1 = jnp.sum(y, axis=1, keepdims=True)        # two independent reductions
            s2 = jnp.sum(y * y, axis=1, keepdims=True)
            mean = s1 * inv_m
            var = jnp.maximum(s2 * inv_m - mean * mean, 0.0)
            return (y - mean) * jax.lax.rsqrt(var + _EPS)

        # --- 1x1 conv as VPU broadcast MACs (C=8 << MXU tile; no MXU) ---
        def conv1x1(x, wt):                               # x: (Cin, M), wt: (Cout, Cin)
            cin = wt.shape[1]
            acc = wt[:, 0:1] * x[0:1, :]
            for ci in range(1, cin):
                acc = acc + wt[:, ci:ci + 1] * x[ci:ci + 1, :]
            return acc

        # --- depthwise KxK conv (stride 1, dilation dil), padding via masks ---
        def dwconv(x, dwt, K, dil):                       # x: (C, M), dwt: (C, K*K)
            pad = dil * (K // 2)
            acc = None
            for i in range(K):
                for j in range(K):
                    oh, ow = i * dil - pad, j * dil - pad
                    if oh == 0 and ow == 0:
                        tap = x
                    else:
                        tap = roll(x, oh * W + ow) * maskf(oh, ow)
                    term = tap * dwt[:, i * K + j: i * K + j + 1]
                    acc = term if acc is None else acc + term
            return acc

        def maxpool3(x):
            acc = None
            for i in range(3):
                for j in range(3):
                    oh, ow = i - 1, j - 1
                    if oh == 0 and ow == 0:
                        tap = x
                    else:
                        tap = jnp.where(maskb(oh, ow), roll(x, oh * W + ow),
                                        jnp.float32(-_NEG_BIG))
                    acc = tap if acc is None else jnp.maximum(acc, tap)
            return acc

        def avgpool3(x):
            acc = None
            for i in range(3):
                for j in range(3):
                    oh, ow = i - 1, j - 1
                    if oh == 0 and ow == 0:
                        term = x
                    else:
                        term = roll(x, oh * W + ow) * maskf(oh, ow)
                    acc = term if acc is None else acc + term
            return acc * inv_cnt                          # count_include_pad=False

        # --- preprocess: ReLU -> 1x1 conv (NCHW-flat input -> (C, M)) -> BN ---
        def preprocess(x_ref, w_idx):                     # x_ref: (N*Cin, HW)
            x = jnp.maximum(x_ref[...], 0.0)
            wt = getw(w_idx)                              # (C, Cin)
            cin = wt.shape[1]
            cols = []
            for n in range(N):
                accn = wt[:, 0:1] * x[n * cin:n * cin + 1, :]
                for ci in range(1, cin):
                    r = n * cin + ci
                    accn = accn + wt[:, ci:ci + 1] * x[r:r + 1, :]
                cols.append(accn)                         # (C, HW)
            y = cols[0] if N == 1 else jnp.concatenate(cols, axis=1)   # (C, M)
            return bn(y)

        def run_edge(op, x):
            kind = op[0]
            if kind == "skip":                            # Identity (stride 1)
                return x
            if kind == "max_pool":                        # pool + BN(affine=False)
                return bn(maxpool3(x))
            if kind == "avg_pool":
                return bn(avgpool3(x))
            if kind == "dil":                             # ReLU-dw(dil=2)-pw-BN
                _, K, dil, i_dw, i_pw = op
                y = dwconv(jnp.maximum(x, 0.0), getw(i_dw), K, dil)
                return bn(conv1x1(y, getw(i_pw)))
            if kind == "sep":                             # (ReLU-dw-pw-BN) x 2
                _, K, i_dw1, i_pw1, i_dw2, i_pw2 = op
                y = dwconv(jnp.maximum(x, 0.0), getw(i_dw1), K, 1)
                y = bn(conv1x1(y, getw(i_pw1)))
                y = dwconv(jnp.maximum(y, 0.0), getw(i_dw2), K, 1)
                return bn(conv1x1(y, getw(i_pw2)))
            raise NotImplementedError(kind)

        # preprocess0/1 = ReLUConvBN(C_in, C, 1, 1, 0, affine=False)
        states = [preprocess(s0_ref, 0), preprocess(s1_ref, 1)]

        # Cell DAG: each new node sums its (non-'none') incoming edge outputs.
        for node_edges in plan:
            acc = None
            for src, op in node_edges:
                y = run_edge(op, states[src])
                acc = y if acc is None else acc + y
            if acc is None:                               # every incoming edge was 'none'
                acc = jnp.zeros((C, M), jnp.float32)
            states.append(acc)

        # torch.cat(states[-multiplier:], dim=1), emitted as NCHW row bands directly.
        outs = states[-multiplier:]
        for n in range(N):
            for k, st in enumerate(outs):
                r0 = (n * multiplier + k) * C
                out_ref[r0:r0 + C, :] = st[:, n * HW:(n + 1) * HW]

    return kernel


# ----------------------------------------------------------------------------
# InnerCell wrapper (NCHW in / NCHW out; only free contiguous reshapes outside).
# ----------------------------------------------------------------------------
class InnerCellPallas:
    def __init__(self, steps, multiplier, C_prev_prev, C_prev, C,
                 reduction, reduction_prev, weights, key):
        # TODO(synk): FactorizedReduce / reduction-cell (stride-2) variant not implemented.
        assert not reduction and not reduction_prev, \
            "reduction / reduction_prev cells not implemented"
        self._steps = steps
        self._multiplier = multiplier
        self._C = C

        k0, k1, kops = jax.random.split(key, 3)
        # 1x1 conv weights stored pre-transposed as (Cout, Cin); depthwise as (C, K*K).
        self._weights = [
            0.1 * jax.random.normal(k0, (C, C_prev_prev), jnp.float32),  # preprocess0
            0.1 * jax.random.normal(k1, (C, C_prev), jnp.float32),       # preprocess1
        ]

        w_np = np.asarray(weights)            # concrete alphas required at build time
        n_edges = sum(2 + i for i in range(steps))
        edge_keys = jax.random.split(kops, n_edges)

        # plan[i] = [(src_state_idx, op_descriptor), ...] for node 2+i ('none' pruned)
        self._plan = []
        offset = 0
        eidx = 0
        for i in range(steps):
            node = []
            for j in range(2 + i):
                stride = 2 if reduction and j < 2 else 1
                assert stride == 1
                choice = OPS_KEYS[int(np.argmax(w_np[offset + j]))]
                op = self._make_op(choice, C, edge_keys[eidx])
                eidx += 1
                if op is not None:            # 'none' (Zero) edges contribute nothing
                    node.append((j, op))
            offset += 2 + i
            self._plan.append(node)

        # Pack every small weight into ONE (C, n_slots*128) slab; slot i occupies the
        # 128-lane-aligned band [i*128, i*128 + cols_i) -> a single prologue DMA.
        self._slot_cols = [int(w.shape[1]) for w in self._weights]
        wpack = np.zeros((C, len(self._weights) * 128), np.float32)
        for i, w in enumerate(self._weights):
            wpack[:, i * 128:i * 128 + w.shape[1]] = np.asarray(w)
        self._wpack = jnp.asarray(wpack)

        self._cache = {}                      # (N, C0, C1, H, W) -> (jitted fwd, aux)

    def _add_weight(self, w):
        self._weights.append(w)
        return len(self._weights) - 1

    def _make_op(self, choice, C, key):
        if choice == "none":
            return None
        if choice == "skip_connect":
            return ("skip",)
        if choice == "max_pool_3x3":
            return ("max_pool",)
        if choice == "avg_pool_3x3":
            return ("avg_pool",)
        if choice in ("sep_conv_3x3", "sep_conv_5x5"):
            K = 3 if choice.endswith("3x3") else 5
            k1, k2, k3, k4 = jax.random.split(key, 4)
            i_dw1 = self._add_weight(0.1 * jax.random.normal(k1, (C, K * K), jnp.float32))
            i_pw1 = self._add_weight(0.1 * jax.random.normal(k2, (C, C), jnp.float32))
            i_dw2 = self._add_weight(0.1 * jax.random.normal(k3, (C, K * K), jnp.float32))
            i_pw2 = self._add_weight(0.1 * jax.random.normal(k4, (C, C), jnp.float32))
            return ("sep", K, i_dw1, i_pw1, i_dw2, i_pw2)
        if choice in ("dil_conv_3x3", "dil_conv_5x5"):
            K = 3 if choice.endswith("3x3") else 5
            k1, k2 = jax.random.split(key, 2)
            i_dw = self._add_weight(0.1 * jax.random.normal(k1, (C, K * K), jnp.float32))
            i_pw = self._add_weight(0.1 * jax.random.normal(k2, (C, C), jnp.float32))
            return ("dil", K, 2, i_dw, i_pw)
        raise NotImplementedError(choice)

    def _get_forward(self, N, C0, C1, H, W):
        key = (N, C0, C1, H, W)
        if key in self._cache:
            return self._cache[key]
        C, mult = self._C, self._multiplier
        HW, M = H * W, N * H * W

        # Host-precomputed per-position constants:
        #   row 0        : 1 / avg-pool divisor (count_include_pad=False)
        #   rows 1..n_off: f32 validity masks for every (oh, ow) offset the plan uses
        s = np.arange(M, dtype=np.int64)
        w_i = s % W
        h_i = (s // W) % H
        rcnt = np.minimum(h_i + 1, H - 1) - np.maximum(h_i - 1, 0) + 1
        ccnt = np.minimum(w_i + 1, W - 1) - np.maximum(w_i - 1, 0) + 1
        rows = [(1.0 / (rcnt * ccnt)).astype(np.float32)]

        offsets = _collect_offsets(self._plan)
        off2row = {}
        for idx, (oh, ow) in enumerate(offsets):
            m = ((h_i + oh >= 0) & (h_i + oh < H) &
                 (w_i + ow >= 0) & (w_i + ow < W)).astype(np.float32)
            rows.append(m)
            off2row[(oh, ow)] = 1 + idx
        aux = jnp.asarray(np.stack(rows, axis=0))             # (1 + n_off, M)

        kernel = _build_cell_kernel(self._plan, mult, C, N, H, W,
                                    off2row, self._slot_cols)
        # Single no-grid invocation; everything resident in VMEM (tens of KiB, well
        # under even v7x's limit). Explicit vmem_limit_bytes future-proofs scaling.
        call = pl.pallas_call(
            kernel,
            out_shape=jax.ShapeDtypeStruct((N * mult * C, HW), jnp.float32),
            in_specs=[pl.BlockSpec(memory_space=pltpu.MemorySpace.VMEM)] * 4,
            out_specs=pl.BlockSpec(memory_space=pltpu.MemorySpace.VMEM),
            compiler_params=pltpu.CompilerParams(vmem_limit_bytes=32 * 1024 * 1024),
        )

        def fwd(s0, s1, aux_in, wpack):
            y = call(s0.reshape(N * C0, HW).astype(jnp.float32),
                     s1.reshape(N * C1, HW).astype(jnp.float32),
                     aux_in, wpack)
            return y.reshape(N, mult * C, H, W)

        fwd = jax.jit(fwd)
        self._cache[key] = (fwd, aux)
        return fwd, aux

    def __call__(self, s0, s1):
        # s0: (N, C_prev_prev, H, W), s1: (N, C_prev, H, W) -- PyTorch NCHW.
        N, C0, H, W = s0.shape
        C1 = s1.shape[1]
        fwd, aux = self._get_forward(N, C0, C1, H, W)
        return fwd(s0, s1, aux, self._wpack)


if __name__ == "__main__":
    key = jax.random.PRNGKey(0)
    kx0, kx1, kw, kp = jax.random.split(key, 4)

    N, C_pp, C_p, C, H, W = 2, 8, 8, 8, 16, 16
    steps, multiplier = 2, 2

    s0 = jax.random.normal(kx0, (N, C_pp, H, W), jnp.float32)
    s1 = jax.random.normal(kx1, (N, C_p, H, W), jnp.float32)

    n_edges = sum(2 + i for i in range(steps))
    alphas = jax.nn.softmax(
        jax.random.normal(kw, (n_edges, len(OPS_KEYS)), jnp.float32), axis=-1)

    cell = InnerCellPallas(steps, multiplier, C_pp, C_p, C,
                           reduction=False, reduction_prev=False,
                           weights=alphas, key=kp)
    out = cell(s0, s1)
    out = jax.block_until_ready(out)
    assert out.shape == (N, multiplier * C, H, W), out.shape
    assert bool(jnp.all(jnp.isfinite(out)))
    print("KERNEL_OK")
</pallas_src>

<mosaic_0001>
module attributes {stable_mosaic.version = 11 : i64} {
  func.func @kernel(%arg0: memref<16x256xf32, #tpu.memory_space<vmem>>, %arg1: memref<16x256xf32, #tpu.memory_space<vmem>>, %arg2: memref<9x512xf32, #tpu.memory_space<vmem>>, %arg3: memref<8x256xf32, #tpu.memory_space<vmem>>, %arg4: memref<32x256xf32, #tpu.memory_space<vmem>>) attributes {dimension_semantics = [], scalar_prefetch = 0 : i64, scratch_operands = 0 : i64, tpu.core_type = #tpu.core_type<tc>} {
    %c0 = arith.constant 0 : index
    %c0_0 = arith.constant 0 : index
    %0 = vector.load %arg2[%c0, %c0_0] : memref<9x512xf32, #tpu.memory_space<vmem>>, vector<1x512xf32>
    %c0_1 = arith.constant 0 : index
    %c0_2 = arith.constant 0 : index
    %1 = vector.load %arg0[%c0_1, %c0_2] : memref<16x256xf32, #tpu.memory_space<vmem>>, vector<16x256xf32>
    %cst = arith.constant 0.000000e+00 : f32
    %2 = vector.broadcast %cst : f32 to vector<16x256xf32>
    %3 = arith.maximumf %1, %2 : vector<16x256xf32>
    %c0_3 = arith.constant 0 : index
    %c0_4 = arith.constant 0 : index
    %4 = vector.load %arg3[%c0_3, %c0_4] : memref<8x256xf32, #tpu.memory_space<vmem>>, vector<8x8xf32>
    %5 = vector.extract_strided_slice %4 {offsets = [0, 0], sizes = [8, 1], strides = [1, 1]} : vector<8x8xf32> to vector<8x1xf32>
    %6 = vector.extract_strided_slice %3 {offsets = [0, 0], sizes = [1, 256], strides = [1, 1]} : vector<16x256xf32> to vector<1x256xf32>
    %7 = vector.broadcast %5 : vector<8x1xf32> to vector<8x256xf32>
    %8 = vector.broadcast %6 : vector<1x256xf32> to vector<8x256xf32>
    %9 = arith.mulf %7, %8 : vector<8x256xf32>
    %10 = vector.extract_strided_slice %4 {offsets = [0, 1], sizes = [8, 1], strides = [1, 1]} : vector<8x8xf32> to vector<8x1xf32>
    %11 = vector.extract_strided_slice %3 {offsets = [1, 0], sizes = [1, 256], strides = [1, 1]} : vector<16x256xf32> to vector<1x256xf32>
    %12 = vector.broadcast %10 : vector<8x1xf32> to vector<8x256xf32>
    %13 = vector.broadcast %11 : vector<1x256xf32> to vector<8x256xf32>
    %14 = arith.mulf %12, %13 : vector<8x256xf32>
    %15 = arith.addf %9, %14 : vector<8x256xf32>
    %16 = vector.extract_strided_slice %4 {offsets = [0, 2], sizes = [8, 1], strides = [1, 1]} : vector<8x8xf32> to vector<8x1xf32>
    %17 = vector.extract_strided_slice %3 {offsets = [2, 0], sizes = [1, 256], strides = [1, 1]} : vector<16x256xf32> to vector<1x256xf32>
    %18 = vector.broadcast %16 : vector<8x1xf32> to vector<8x256xf32>
    %19 = vector.broadcast %17 : vector<1x256xf32> to vector<8x256xf32>
    %20 = arith.mulf %18, %19 : vector<8x256xf32>
    %21 = arith.addf %15, %20 : vector<8x256xf32>
    %22 = vector.extract_strided_slice %4 {offsets = [0, 3], sizes = [8, 1], strides = [1, 1]} : vector<8x8xf32> to vector<8x1xf32>
    %23 = vector.extract_strided_slice %3 {offsets = [3, 0], sizes = [1, 256], strides = [1, 1]} : vector<16x256xf32> to vector<1x256xf32>
    %24 = vector.broadcast %22 : vector<8x1xf32> to vector<8x256xf32>
    %25 = vector.broadcast %23 : vector<1x256xf32> to vector<8x256xf32>
    %26 = arith.mulf %24, %25 : vector<8x256xf32>
    %27 = arith.addf %21, %26 : vector<8x256xf32>
    %28 = vector.extract_strided_slice %4 {offsets = [0, 4], sizes = [8, 1], strides = [1, 1]} : vector<8x8xf32> to vector<8x1xf32>
    %29 = vector.extract_strided_slice %3 {offsets = [4, 0], sizes = [1, 256], strides = [1, 1]} : vector<16x256xf32> to vector<1x256xf32>
    %30 = vector.broadcast %28 : vector<8x1xf32> to vector<8x256xf32>
    %31 = vector.broadcast %29 : vector<1x256xf32> to vector<8x256xf32>
    %32 = arith.mulf %30, %31 : vector<8x256xf32>
    %33 = arith.addf %27, %32 : vector<8x256xf32>
    %34 = vector.extract_strided_slice %4 {offsets = [0, 5], sizes = [8, 1], strides = [1, 1]} : vector<8x8xf32> to vector<8x1xf32>
    %35 = vector.extract_strided_slice %3 {offsets = [5, 0], sizes = [1, 256], strides = [1, 1]} : vector<16x256xf32> to vector<1x256xf32>
    %36 = vector.broadcast %34 : vector<8x1xf32> to vector<8x256xf32>
    %37 = vector.broadcast %35 : vector<1x256xf32> to vector<8x256xf32>
    %38 = arith.mulf %36, %37 : vector<8x256xf32>
    %39 = arith.addf %33, %38 : vector<8x256xf32>
    %40 = vector.extract_strided_slice %4 {offsets = [0, 6], sizes = [8, 1], strides = [1, 1]} : vector<8x8xf32> to vector<8x1xf32>
    %41 = vector.extract_strided_slice %3 {offsets = [6, 0], sizes = [1, 256], strides = [1, 1]} : vector<16x256xf32> to vector<1x256xf32>
    %42 = vector.broadcast %40 : vector<8x1xf32> to vector<8x256xf32>
    %43 = vector.broadcast %41 : vector<1x256xf32> to vector<8x256xf32>
    %44 = arith.mulf %42, %43 : vector<8x256xf32>
    %45 = arith.addf %39, %44 : vector<8x256xf32>
    %46 = vector.extract_strided_slice %4 {offsets = [0, 7], sizes = [8, 1], strides = [1, 1]} : vector<8x8xf32> to vector<8x1xf32>
    %47 = vector.extract_strided_slice %3 {offsets = [7, 0], sizes = [1, 256], strides = [1, 1]} : vector<16x256xf32> to vector<1x256xf32>
    %48 = vector.broadcast %46 : vector<8x1xf32> to vector<8x256xf32>
    %49 = vector.broadcast %47 : vector<1x256xf32> to vector<8x256xf32>
    %50 = arith.mulf %48, %49 : vector<8x256xf32>
    %51 = arith.addf %45, %50 : vector<8x256xf32>
    %52 = vector.extract_strided_slice %4 {offsets = [0, 0], sizes = [8, 1], strides = [1, 1]} : vector<8x8xf32> to vector<8x1xf32>
    %53 = vector.extract_strided_slice %3 {offsets = [8, 0], sizes = [1, 256], strides = [1, 1]} : vector<16x256xf32> to vector<1x256xf32>
    %54 = vector.broadcast %52 : vector<8x1xf32> to vector<8x256xf32>
    %55 = vector.broadcast %53 : vector<1x256xf32> to vector<8x256xf32>
    %56 = arith.mulf %54, %55 : vector<8x256xf32>
    %57 = vector.extract_strided_slice %4 {offsets = [0, 1], sizes = [8, 1], strides = [1, 1]} : vector<8x8xf32> to vector<8x1xf32>
    %58 = vector.extract_strided_slice %3 {offsets = [9, 0], sizes = [1, 256], strides = [1, 1]} : vector<16x256xf32> to vector<1x256xf32>
    %59 = vector.broadcast %57 : vector<8x1xf32> to vector<8x256xf32>
    %60 = vector.broadcast %58 : vector<1x256xf32> to vector<8x256xf32>
    %61 = arith.mulf %59, %60 : vector<8x256xf32>
    %62 = arith.addf %56, %61 : vector<8x256xf32>
    %63 = vector.extract_strided_slice %4 {offsets = [0, 2], sizes = [8, 1], strides = [1, 1]} : vector<8x8xf32> to vector<8x1xf32>
    %64 = vector.extract_strided_slice %3 {offsets = [10, 0], sizes = [1, 256], strides = [1, 1]} : vector<16x256xf32> to vector<1x256xf32>
    %65 = vector.broadcast %63 : vector<8x1xf32> to vector<8x256xf32>
    %66 = vector.broadcast %64 : vector<1x256xf32> to vector<8x256xf32>
    %67 = arith.mulf %65, %66 : vector<8x256xf32>
    %68 = arith.addf %62, %67 : vector<8x256xf32>
    %69 = vector.extract_strided_slice %4 {offsets = [0, 3], sizes = [8, 1], strides = [1, 1]} : vector<8x8xf32> to vector<8x1xf32>
    %70 = vector.extract_strided_slice %3 {offsets = [11, 0], sizes = [1, 256], strides = [1, 1]} : vector<16x256xf32> to vector<1x256xf32>
    %71 = vector.broadcast %69 : vector<8x1xf32> to vector<8x256xf32>
    %72 = vector.broadcast %70 : vector<1x256xf32> to vector<8x256xf32>
    %73 = arith.mulf %71, %72 : vector<8x256xf32>
    %74 = arith.addf %68, %73 : vector<8x256xf32>
    %75 = vector.extract_strided_slice %4 {offsets = [0, 4], sizes = [8, 1], strides = [1, 1]} : vector<8x8xf32> to vector<8x1xf32>
    %76 = vector.extract_strided_slice %3 {offsets = [12, 0], sizes = [1, 256], strides = [1, 1]} : vector<16x256xf32> to vector<1x256xf32>
    %77 = vector.broadcast %75 : vector<8x1xf32> to vector<8x256xf32>
    %78 = vector.broadcast %76 : vector<1x256xf32> to vector<8x256xf32>
    %79 = arith.mulf %77, %78 : vector<8x256xf32>
    %80 = arith.addf %74, %79 : vector<8x256xf32>
    %81 = vector.extract_strided_slice %4 {offsets = [0, 5], sizes = [8, 1], strides = [1, 1]} : vector<8x8xf32> to vector<8x1xf32>
    %82 = vector.extract_strided_slice %3 {offsets = [13, 0], sizes = [1, 256], strides = [1, 1]} : vector<16x256xf32> to vector<1x256xf32>
    %83 = vector.broadcast %81 : vector<8x1xf32> to vector<8x256xf32>
    %84 = vector.broadcast %82 : vector<1x256xf32> to vector<8x256xf32>
    %85 = arith.mulf %83, %84 : vector<8x256xf32>
    %86 = arith.addf %80, %85 : vector<8x256xf32>
    %87 = vector.extract_strided_slice %4 {offsets = [0, 6], sizes = [8, 1], strides = [1, 1]} : vector<8x8xf32> to vector<8x1xf32>
    %88 = vector.extract_strided_slice %3 {offsets = [14, 0], sizes = [1, 256], strides = [1, 1]} : vector<16x256xf32> to vector<1x256xf32>
    %89 = vector.broadcast %87 : vector<8x1xf32> to vector<8x256xf32>
    %90 = vector.broadcast %88 : vector<1x256xf32> to vector<8x256xf32>
    %91 = arith.mulf %89, %90 : vector<8x256xf32>
    %92 = arith.addf %86, %91 : vector<8x256xf32>
    %93 = vector.extract_strided_slice %4 {offsets = [0, 7], sizes = [8, 1], strides = [1, 1]} : vector<8x8xf32> to vector<8x1xf32>
    %94 = vector.extract_strided_slice %3 {offsets = [15, 0], sizes = [1, 256], strides = [1, 1]} : vector<16x256xf32> to vector<1x256xf32>
    %95 = vector.broadcast %93 : vector<8x1xf32> to vector<8x256xf32>
    %96 = vector.broadcast %94 : vector<1x256xf32> to vector<8x256xf32>
    %97 = arith.mulf %95, %96 : vector<8x256xf32>
    %98 = arith.addf %92, %97 : vector<8x256xf32>
    %99 = tpu.concatenate %51, %98 in 1 : vector<8x256xf32>, vector<8x256xf32> -> vector<8x512xf32>
    %cst_5 = arith.constant dense<0.000000e+00> : vector<8xf32>
    %100 = vector.multi_reduction <add>, %99, %cst_5 [1] : vector<8x512xf32> to vector<8xf32>
    %101 = vector.shape_cast %100 : vector<8xf32> to vector<8x1xf32>
    %102 = arith.mulf %99, %99 : vector<8x512xf32>
    %cst_6 = arith.constant dense<0.000000e+00> : vector<8xf32>
    %103 = vector.multi_reduction <add>, %102, %cst_6 [1] : vector<8x512xf32> to vector<8xf32>
    %104 = vector.shape_cast %103 : vector<8xf32> to vector<8x1xf32>
    %cst_7 = arith.constant 0.001953125 : f32
    %105 = vector.broadcast %cst_7 : f32 to vector<8x1xf32>
    %106 = arith.mulf %101, %105 : vector<8x1xf32>
    %cst_8 = arith.constant 0.001953125 : f32
    %107 = vector.broadcast %cst_8 : f32 to vector<8x1xf32>
    %108 = arith.mulf %104, %107 : vector<8x1xf32>
    %109 = arith.mulf %106, %106 : vector<8x1xf32>
    %110 = arith.subf %108, %109 : vector<8x1xf32>
    %cst_9 = arith.constant 0.000000e+00 : f32
    %111 = vector.broadcast %cst_9 : f32 to vector<8x1xf32>
    %112 = arith.maximumf %110, %111 : vector<8x1xf32>
    %113 = vector.broadcast %106 : vector<8x1xf32> to vector<8x512xf32>
    %114 = arith.subf %99, %113 : vector<8x512xf32>
    %cst_10 = arith.constant 9.99999974E-6 : f32
    %115 = vector.broadcast %cst_10 : f32 to vector<8x1xf32>
    %116 = arith.addf %112, %115 : vector<8x1xf32>
    %117 = math.rsqrt %116 : vector<8x1xf32>
    %118 = vector.broadcast %117 : vector<8x1xf32> to vector<8x512xf32>
    %119 = arith.mulf %114, %118 : vector<8x512xf32>
    %c0_11 = arith.constant 0 : index
    %c0_12 = arith.constant 0 : index
    %120 = vector.load %arg1[%c0_11, %c0_12] : memref<16x256xf32, #tpu.memory_space<vmem>>, vector<16x256xf32>
    %cst_13 = arith.constant 0.000000e+00 : f32
    %121 = vector.broadcast %cst_13 : f32 to vector<16x256xf32>
    %122 = arith.maximumf %120, %121 : vector<16x256xf32>
    %c0_14 = arith.constant 0 : index
    %c128 = arith.constant 128 : index
    %123 = vector.load %arg3[%c0_14, %c128] : memref<8x256xf32, #tpu.memory_space<vmem>>, vector<8x8xf32>
    %124 = vector.extract_strided_slice %123 {offsets = [0, 0], sizes = [8, 1], strides = [1, 1]} : vector<8x8xf32> to vector<8x1xf32>
    %125 = vector.extract_strided_slice %122 {offsets = [0, 0], sizes = [1, 256], strides = [1, 1]} : vector<16x256xf32> to vector<1x256xf32>
    %126 = vector.broadcast %124 : vector<8x1xf32> to vector<8x256xf32>
    %127 = vector.broadcast %125 : vector<1x256xf32> to vector<8x256xf32>
    %128 = arith.mulf %126, %127 : vector<8x256xf32>
    %129 = vector.extract_strided_slice %123 {offsets = [0, 1], sizes = [8, 1], strides = [1, 1]} : vector<8x8xf32> to vector<8x1xf32>
    %130 = vector.extract_strided_slice %122 {offsets = [1, 0], sizes = [1, 256], strides = [1, 1]} : vector<16x256xf32> to vector<1x256xf32>
    %131 = vector.broadcast %129 : vector<8x1xf32> to vector<8x256xf32>
    %132 = vector.broadcast %130 : vector<1x256xf32> to vector<8x256xf32>
    %133 = arith.mulf %131, %132 : vector<8x256xf32>
    %134 = arith.addf %128, %133 : vector<8x256xf32>
    %135 = vector.extract_strided_slice %123 {offsets = [0, 2], sizes = [8, 1], strides = [1, 1]} : vector<8x8xf32> to vector<8x1xf32>
    %136 = vector.extract_strided_slice %122 {offsets = [2, 0], sizes = [1, 256], strides = [1, 1]} : vector<16x256xf32> to vector<1x256xf32>
    %137 = vector.broadcast %135 : vector<8x1xf32> to vector<8x256xf32>
    %138 = vector.broadcast %136 : vector<1x256xf32> to vector<8x256xf32>
    %139 = arith.mulf %137, %138 : vector<8x256xf32>
    %140 = arith.addf %134, %139 : vector<8x256xf32>
    %141 = vector.extract_strided_slice %123 {offsets = [0, 3], sizes = [8, 1], strides = [1, 1]} : vector<8x8xf32> to vector<8x1xf32>
    %142 = vector.extract_strided_slice %122 {offsets = [3, 0], sizes = [1, 256], strides = [1, 1]} : vector<16x256xf32> to vector<1x256xf32>
    %143 = vector.broadcast %141 : vector<8x1xf32> to vector<8x256xf32>
    %144 = vector.broadcast %142 : vector<1x256xf32> to vector<8x256xf32>
    %145 = arith.mulf %143, %144 : vector<8x256xf32>
    %146 = arith.addf %140, %145 : vector<8x256xf32>
    %147 = vector.extract_strided_slice %123 {offsets = [0, 4], sizes = [8, 1], strides = [1, 1]} : vector<8x8xf32> to vector<8x1xf32>
    %148 = vector.extract_strided_slice %122 {offsets = [4, 0], sizes = [1, 256], strides = [1, 1]} : vector<16x256xf32> to vector<1x256xf32>
    %149 = vector.broadcast %147 : vector<8x1xf32> to vector<8x256xf32>
    %150 = vector.broadcast %148 : vector<1x256xf32> to vector<8x256xf32>
    %151 = arith.mulf %149, %150 : vector<8x256xf32>
    %152 = arith.addf %146, %151 : vector<8x256xf32>
    %153 = vector.extract_strided_slice %123 {offsets = [0, 5], sizes = [8, 1], strides = [1, 1]} : vector<8x8xf32> to vector<8x1xf32>
    %154 = vector.extract_strided_slice %122 {offsets = [5, 0], sizes = [1, 256], strides = [1, 1]} : vector<16x256xf32> to vector<1x256xf32>
    %155 = vector.broadcast %153 : vector<8x1xf32> to vector<8x256xf32>
    %156 = vector.broadcast %154 : vector<1x256xf32> to vector<8x256xf32>
    %157 = arith.mulf %155, %156 : vector<8x256xf32>
    %158 = arith.addf %152, %157 : vector<8x256xf32>
    %159 = vector.extract_strided_slice %123 {offsets = [0, 6], sizes = [8, 1], strides = [1, 1]} : vector<8x8xf32> to vector<8x1xf32>
    %160 = vector.extract_strided_slice %122 {offsets = [6, 0], sizes = [1, 256], strides = [1, 1]} : vector<16x256xf32> to vector<1x256xf32>
    %161 = vector.broadcast %159 : vector<8x1xf32> to vector<8x256xf32>
    %162 = vector.broadcast %160 : vector<1x256xf32> to vector<8x256xf32>
    %163 = arith.mulf %161, %162 : vector<8x256xf32>
    %164 = arith.addf %158, %163 : vector<8x256xf32>
    %165 = vector.extract_strided_slice %123 {offsets = [0, 7], sizes = [8, 1], strides = [1, 1]} : vector<8x8xf32> to vector<8x1xf32>
    %166 = vector.extract_strided_slice %122 {offsets = [7, 0], sizes = [1, 256], strides = [1, 1]} : vector<16x256xf32> to vector<1x256xf32>
    %167 = vector.broadcast %165 : vector<8x1xf32> to vector<8x256xf32>
    %168 = vector.broadcast %166 : vector<1x256xf32> to vector<8x256xf32>
    %169 = arith.mulf %167, %168 : vector<8x256xf32>
    %170 = arith.addf %164, %169 : vector<8x256xf32>
    %171 = vector.extract_strided_slice %123 {offsets = [0, 0], sizes = [8, 1], strides = [1, 1]} : vector<8x8xf32> to vector<8x1xf32>
    %172 = vector.extract_strided_slice %122 {offsets = [8, 0], sizes = [1, 256], strides = [1, 1]} : vector<16x256xf32> to vector<1x256xf32>
    %173 = vector.broadcast %171 : vector<8x1xf32> to vector<8x256xf32>
    %174 = vector.broadcast %172 : vector<1x256xf32> to vector<8x256xf32>
    %175 = arith.mulf %173, %174 : vector<8x256xf32>
    %176 = vector.extract_strided_slice %123 {offsets = [0, 1], sizes = [8, 1], strides = [1, 1]} : vector<8x8xf32> to vector<8x1xf32>
    %177 = vector.extract_strided_slice %122 {offsets = [9, 0], sizes = [1, 256], strides = [1, 1]} : vector<16x256xf32> to vector<1x256xf32>
    %178 = vector.broadcast %176 : vector<8x1xf32> to vector<8x256xf32>
    %179 = vector.broadcast %177 : vector<1x256xf32> to vector<8x256xf32>
    %180 = arith.mulf %178, %179 : vector<8x256xf32>
    %181 = arith.addf %175, %180 : vector<8x256xf32>
    %182 = vector.extract_strided_slice %123 {offsets = [0, 2], sizes = [8, 1], strides = [1, 1]} : vector<8x8xf32> to vector<8x1xf32>
    %183 = vector.extract_strided_slice %122 {offsets = [10, 0], sizes = [1, 256], strides = [1, 1]} : vector<16x256xf32> to vector<1x256xf32>
    %184 = vector.broadcast %182 : vector<8x1xf32> to vector<8x256xf32>
    %185 = vector.broadcast %183 : vector<1x256xf32> to vector<8x256xf32>
    %186 = arith.mulf %184, %185 : vector<8x256xf32>
    %187 = arith.addf %181, %186 : vector<8x256xf32>
    %188 = vector.extract_strided_slice %123 {offsets = [0, 3], sizes = [8, 1], strides = [1, 1]} : vector<8x8xf32> to vector<8x1xf32>
    %189 = vector.extract_strided_slice %122 {offsets = [11, 0], sizes = [1, 256], strides = [1, 1]} : vector<16x256xf32> to vector<1x256xf32>
    %190 = vector.broadcast %188 : vector<8x1xf32> to vector<8x256xf32>
    %191 = vector.broadcast %189 : vector<1x256xf32> to vector<8x256xf32>
    %192 = arith.mulf %190, %191 : vector<8x256xf32>
    %193 = arith.addf %187, %192 : vector<8x256xf32>
    %194 = vector.extract_strided_slice %123 {offsets = [0, 4], sizes = [8, 1], strides = [1, 1]} : vector<8x8xf32> to vector<8x1xf32>
    %195 = vector.extract_strided_slice %122 {offsets = [12, 0], sizes = [1, 256], strides = [1, 1]} : vector<16x256xf32> to vector<1x256xf32>
    %196 = vector.broadcast %194 : vector<8x1xf32> to vector<8x256xf32>
    %197 = vector.broadcast %195 : vector<1x256xf32> to vector<8x256xf32>
    %198 = arith.mulf %196, %197 : vector<8x256xf32>
    %199 = arith.addf %193, %198 : vector<8x256xf32>
    %200 = vector.extract_strided_slice %123 {offsets = [0, 5], sizes = [8, 1], strides = [1, 1]} : vector<8x8xf32> to vector<8x1xf32>
    %201 = vector.extract_strided_slice %122 {offsets = [13, 0], sizes = [1, 256], strides = [1, 1]} : vector<16x256xf32> to vector<1x256xf32>
    %202 = vector.broadcast %200 : vector<8x1xf32> to vector<8x256xf32>
    %203 = vector.broadcast %201 : vector<1x256xf32> to vector<8x256xf32>
    %204 = arith.mulf %202, %203 : vector<8x256xf32>
    %205 = arith.addf %199, %204 : vector<8x256xf32>
    %206 = vector.extract_strided_slice %123 {offsets = [0, 6], sizes = [8, 1], strides = [1, 1]} : vector<8x8xf32> to vector<8x1xf32>
    %207 = vector.extract_strided_slice %122 {offsets = [14, 0], sizes = [1, 256], strides = [1, 1]} : vector<16x256xf32> to vector<1x256xf32>
    %208 = vector.broadcast %206 : vector<8x1xf32> to vector<8x256xf32>
    %209 = vector.broadcast %207 : vector<1x256xf32> to vector<8x256xf32>
    %210 = arith.mulf %208, %209 : vector<8x256xf32>
    %211 = arith.addf %205, %210 : vector<8x256xf32>
    %212 = vector.extract_strided_slice %123 {offsets = [0, 7], sizes = [8, 1], strides = [1, 1]} : vector<8x8xf32> to vector<8x1xf32>
    %213 = vector.extract_strided_slice %122 {offsets = [15, 0], sizes = [1, 256], strides = [1, 1]} : vector<16x256xf32> to vector<1x256xf32>
    %214 = vector.broadcast %212 : vector<8x1xf32> to vector<8x256xf32>
    %215 = vector.broadcast %213 : vector<1x256xf32> to vector<8x256xf32>
    %216 = arith.mulf %214, %215 : vector<8x256xf32>
    %217 = arith.addf %211, %216 : vector<8x256xf32>
    %218 = tpu.concatenate %170, %217 in 1 : vector<8x256xf32>, vector<8x256xf32> -> vector<8x512xf32>
    %cst_15 = arith.constant dense<0.000000e+00> : vector<8xf32>
    %219 = vector.multi_reduction <add>, %218, %cst_15 [1] : vector<8x512xf32> to vector<8xf32>
    %220 = vector.shape_cast %219 : vector<8xf32> to vector<8x1xf32>
    %221 = arith.mulf %218, %218 : vector<8x512xf32>
    %cst_16 = arith.constant dense<0.000000e+00> : vector<8xf32>
    %222 = vector.multi_reduction <add>, %221, %cst_16 [1] : vector<8x512xf32> to vector<8xf32>
    %223 = vector.shape_cast %222 : vector<8xf32> to vector<8x1xf32>
    %cst_17 = arith.constant 0.001953125 : f32
    %224 = vector.broadcast %cst_17 : f32 to vector<8x1xf32>
    %225 = arith.mulf %220, %224 : vector<8x1xf32>
    %cst_18 = arith.constant 0.001953125 : f32
    %226 = vector.broadcast %cst_18 : f32 to vector<8x1xf32>
    %227 = arith.mulf %223, %226 : vector<8x1xf32>
    %228 = arith.mulf %225, %225 : vector<8x1xf32>
    %229 = arith.subf %227, %228 : vector<8x1xf32>
    %cst_19 = arith.constant 0.000000e+00 : f32
    %230 = vector.broadcast %cst_19 : f32 to vector<8x1xf32>
    %231 = arith.maximumf %229, %230 : vector<8x1xf32>
    %232 = vector.broadcast %225 : vector<8x1xf32> to vector<8x512xf32>
    %233 = arith.subf %218, %232 : vector<8x512xf32>
    %cst_20 = arith.constant 9.99999974E-6 : f32
    %234 = vector.broadcast %cst_20 : f32 to vector<8x1xf32>
    %235 = arith.addf %231, %234 : vector<8x1xf32>
    %236 = math.rsqrt %235 : vector<8x1xf32>
    %237 = vector.broadcast %236 : vector<8x1xf32> to vector<8x512xf32>
    %238 = arith.mulf %233, %237 : vector<8x512xf32>
    %c17_i32 = arith.constant 17 : i32
    %239 = tpu.dynamic_rotate %119 by %c17_i32 dim 1 : vector<8x512xf32>, i32 -> vector<8x512xf32>
    %c1 = arith.constant 1 : index
    %c0_21 = arith.constant 0 : index
    %240 = vector.load %arg2[%c1, %c0_21] : memref<9x512xf32, #tpu.memory_space<vmem>>, vector<1x512xf32>
    %241 = vector.broadcast %240 : vector<1x512xf32> to vector<8x512xf32>
    %242 = arith.mulf %239, %241 : vector<8x512xf32>
    %c16_i32 = arith.constant 16 : i32
    %243 = tpu.dynamic_rotate %119 by %c16_i32 dim 1 : vector<8x512xf32>, i32 -> vector<8x512xf32>
    %c2 = arith.constant 2 : index
    %c0_22 = arith.constant 0 : index
    %244 = vector.load %arg2[%c2, %c0_22] : memref<9x512xf32, #tpu.memory_space<vmem>>, vector<1x512xf32>
    %245 = vector.broadcast %244 : vector<1x512xf32> to vector<8x512xf32>
    %246 = arith.mulf %243, %245 : vector<8x512xf32>
    %247 = arith.addf %242, %246 : vector<8x512xf32>
    %c15_i32 = arith.constant 15 : i32
    %248 = tpu.dynamic_rotate %119 by %c15_i32 dim 1 : vector<8x512xf32>, i32 -> vector<8x512xf32>
    %c3 = arith.constant 3 : index
    %c0_23 = arith.constant 0 : index
    %249 = vector.load %arg2[%c3, %c0_23] : memref<9x512xf32, #tpu.memory_space<vmem>>, vector<1x512xf32>
    %250 = vector.broadcast %249 : vector<1x512xf32> to vector<8x512xf32>
    %251 = arith.mulf %248, %250 : vector<8x512xf32>
    %252 = arith.addf %247, %251 : vector<8x512xf32>
    %c1_i32 = arith.constant 1 : i32
    %253 = tpu.dynamic_rotate %119 by %c1_i32 dim 1 : vector<8x512xf32>, i32 -> vector<8x512xf32>
    %c4 = arith.constant 4 : index
    %c0_24 = arith.constant 0 : index
    %254 = vector.load %arg2[%c4, %c0_24] : memref<9x512xf32, #tpu.memory_space<vmem>>, vector<1x512xf32>
    %255 = vector.broadcast %254 : vector<1x512xf32> to vector<8x512xf32>
    %256 = arith.mulf %253, %255 : vector<8x512xf32>
    %257 = arith.addf %252, %256 : vector<8x512xf32>
    %258 = arith.addf %257, %119 : vector<8x512xf32>
    %c511_i32 = arith.constant 511 : i32
    %259 = tpu.dynamic_rotate %119 by %c511_i32 dim 1 : vector<8x512xf32>, i32 -> vector<8x512xf32>
    %c5 = arith.constant 5 : index
    %c0_25 = arith.constant 0 : index
    %260 = vector.load %arg2[%c5, %c0_25] : memref<9x512xf32, #tpu.memory_space<vmem>>, vector<1x512xf32>
    %261 = vector.broadcast %260 : vector<1x512xf32> to vector<8x512xf32>
    %262 = arith.mulf %259, %261 : vector<8x512xf32>
    %263 = arith.addf %258, %262 : vector<8x512xf32>
    %c497_i32 = arith.constant 497 : i32
    %264 = tpu.dynamic_rotate %119 by %c497_i32 dim 1 : vector<8x512xf32>, i32 -> vector<8x512xf32>
    %c6 = arith.constant 6 : index
    %c0_26 = arith.constant 0 : index
    %265 = vector.load %arg2[%c6, %c0_26] : memref<9x512xf32, #tpu.memory_space<vmem>>, vector<1x512xf32>
    %266 = vector.broadcast %265 : vector<1x512xf32> to vector<8x512xf32>
    %267 = arith.mulf %264, %266 : vector<8x512xf32>
    %268 = arith.addf %263, %267 : vector<8x512xf32>
    %c496_i32 = arith.constant 496 : i32
    %269 = tpu.dynamic_rotate %119 by %c496_i32 dim 1 : vector<8x512xf32>, i32 -> vector<8x512xf32>
    %c7 = arith.constant 7 : index
    %c0_27 = arith.constant 0 : index
    %270 = vector.load %arg2[%c7, %c0_27] : memref<9x512xf32, #tpu.memory_space<vmem>>, vector<1x512xf32>
    %271 = vector.broadcast %270 : vector<1x512xf32> to vector<8x512xf32>
    %272 = arith.mulf %269, %271 : vector<8x512xf32>
    %273 = arith.addf %268, %272 : vector<8x512xf32>
    %c495_i32 = arith.constant 495 : i32
    %274 = tpu.dynamic_rotate %119 by %c495_i32 dim 1 : vector<8x512xf32>, i32 -> vector<8x512xf32>
    %c8 = arith.constant 8 : index
    %c0_28 = arith.constant 0 : index
    %275 = vector.load %arg2[%c8, %c0_28] : memref<9x512xf32, #tpu.memory_space<vmem>>, vector<1x512xf32>
    %276 = vector.broadcast %275 : vector<1x512xf32> to vector<8x512xf32>
    %277 = arith.mulf %274, %276 : vector<8x512xf32>
    %278 = arith.addf %273, %277 : vector<8x512xf32>
    %279 = vector.broadcast %0 : vector<1x512xf32> to vector<8x512xf32>
    %280 = arith.mulf %278, %279 : vector<8x512xf32>
    %cst_29 = arith.constant dense<0.000000e+00> : vector<8xf32>
    %281 = vector.multi_reduction <add>, %280, %cst_29 [1] : vector<8x512xf32> to vector<8xf32>
    %282 = vector.shape_cast %281 : vector<8xf32> to vector<8x1xf32>
    %283 = arith.mulf %280, %280 : vector<8x512xf32>
    %cst_30 = arith.constant dense<0.000000e+00> : vector<8xf32>
    %284 = vector.multi_reduction <add>, %283, %cst_30 [1] : vector<8x512xf32> to vector<8xf32>
    %285 = vector.shape_cast %284 : vector<8xf32> to vector<8x1xf32>
    %cst_31 = arith.constant 0.001953125 : f32
    %286 = vector.broadcast %cst_31 : f32 to vector<8x1xf32>
    %287 = arith.mulf %282, %286 : vector<8x1xf32>
    %cst_32 = arith.constant 0.001953125 : f32
    %288 = vector.broadcast %cst_32 : f32 to vector<8x1xf32>
    %289 = arith.mulf %285, %288 : vector<8x1xf32>
    %290 = arith.mulf %287, %287 : vector<8x1xf32>
    %291 = arith.subf %289, %290 : vector<8x1xf32>
    %cst_33 = arith.constant 0.000000e+00 : f32
    %292 = vector.broadcast %cst_33 : f32 to vector<8x1xf32>
    %293 = arith.maximumf %291, %292 : vector<8x1xf32>
    %294 = vector.broadcast %287 : vector<8x1xf32> to vector<8x512xf32>
    %295 = arith.subf %280, %294 : vector<8x512xf32>
    %cst_34 = arith.constant 9.99999974E-6 : f32
    %296 = vector.broadcast %cst_34 : f32 to vector<8x1xf32>
    %297 = arith.addf %293, %296 : vector<8x1xf32>
    %298 = math.rsqrt %297 : vector<8x1xf32>
    %299 = vector.broadcast %298 : vector<8x1xf32> to vector<8x512xf32>
    %300 = arith.mulf %295, %299 : vector<8x512xf32>
    %301 = arith.addf %300, %238 : vector<8x512xf32>
    %cst_35 = arith.constant 5.000000e-01 : f32
    %302 = vector.broadcast %cst_35 : f32 to vector<1x512xf32>
    %303 = arith.cmpf ogt, %240, %302 : vector<1x512xf32>
    %c17_i32_36 = arith.constant 17 : i32
    %304 = tpu.dynamic_rotate %119 by %c17_i32_36 dim 1 : vector<8x512xf32>, i32 -> vector<8x512xf32>
    %cst_37 = arith.constant -1.000000e+30 : f32
    %305 = vector.shape_cast %303 : vector<1x512xi1> to vector<1x512xi1>
    %306 = vector.broadcast %305 : vector<1x512xi1> to vector<8x512xi1>
    %307 = vector.broadcast %cst_37 : f32 to vector<8x512xf32>
    %308 = arith.select %306, %304, %307 : vector<8x512xi1>, vector<8x512xf32>
    %cst_38 = arith.constant 5.000000e-01 : f32
    %309 = vector.broadcast %cst_38 : f32 to vector<1x512xf32>
    %310 = arith.cmpf ogt, %244, %309 : vector<1x512xf32>
    %c16_i32_39 = arith.constant 16 : i32
    %311 = tpu.dynamic_rotate %119 by %c16_i32_39 dim 1 : vector<8x512xf32>, i32 -> vector<8x512xf32>
    %cst_40 = arith.constant -1.000000e+30 : f32
    %312 = vector.shape_cast %310 : vector<1x512xi1> to vector<1x512xi1>
    %313 = vector.broadcast %312 : vector<1x512xi1> to vector<8x512xi1>
    %314 = vector.broadcast %cst_40 : f32 to vector<8x512xf32>
    %315 = arith.select %313, %311, %314 : vector<8x512xi1>, vector<8x512xf32>
    %316 = arith.maximumf %308, %315 : vector<8x512xf32>
    %cst_41 = arith.constant 5.000000e-01 : f32
    %317 = vector.broadcast %cst_41 : f32 to vector<1x512xf32>
    %318 = arith.cmpf ogt, %249, %317 : vector<1x512xf32>
    %c15_i32_42 = arith.constant 15 : i32
    %319 = tpu.dynamic_rotate %119 by %c15_i32_42 dim 1 : vector<8x512xf32>, i32 -> vector<8x512xf32>
    %cst_43 = arith.constant -1.000000e+30 : f32
    %320 = vector.shape_cast %318 : vector<1x512xi1> to vector<1x512xi1>
    %321 = vector.broadcast %320 : vector<1x512xi1> to vector<8x512xi1>
    %322 = vector.broadcast %cst_43 : f32 to vector<8x512xf32>
    %323 = arith.select %321, %319, %322 : vector<8x512xi1>, vector<8x512xf32>
    %324 = arith.maximumf %316, %323 : vector<8x512xf32>
    %cst_44 = arith.constant 5.000000e-01 : f32
    %325 = vector.broadcast %cst_44 : f32 to vector<1x512xf32>
    %326 = arith.cmpf ogt, %254, %325 : vector<1x512xf32>
    %c1_i32_45 = arith.constant 1 : i32
    %327 = tpu.dynamic_rotate %119 by %c1_i32_45 dim 1 : vector<8x512xf32>, i32 -> vector<8x512xf32>
    %cst_46 = arith.constant -1.000000e+30 : f32
    %328 = vector.shape_cast %326 : vector<1x512xi1> to vector<1x512xi1>
    %329 = vector.broadcast %328 : vector<1x512xi1> to vector<8x512xi1>
    %330 = vector.broadcast %cst_46 : f32 to vector<8x512xf32>
    %331 = arith.select %329, %327, %330 : vector<8x512xi1>, vector<8x512xf32>
    %332 = arith.maximumf %324, %331 : vector<8x512xf32>
    %333 = arith.maximumf %332, %119 : vector<8x512xf32>
    %cst_47 = arith.constant 5.000000e-01 : f32
    %334 = vector.broadcast %cst_47 : f32 to vector<1x512xf32>
    %335 = arith.cmpf ogt, %260, %334 : vector<1x512xf32>
    %c511_i32_48 = arith.constant 511 : i32
    %336 = tpu.dynamic_rotate %119 by %c511_i32_48 dim 1 : vector<8x512xf32>, i32 -> vector<8x512xf32>
    %cst_49 = arith.constant -1.000000e+30 : f32
    %337 = vector.shape_cast %335 : vector<1x512xi1> to vector<1x512xi1>
    %338 = vector.broadcast %337 : vector<1x512xi1> to vector<8x512xi1>
    %339 = vector.broadcast %cst_49 : f32 to vector<8x512xf32>
    %340 = arith.select %338, %336, %339 : vector<8x512xi1>, vector<8x512xf32>
    %341 = arith.maximumf %333, %340 : vector<8x512xf32>
    %cst_50 = arith.constant 5.000000e-01 : f32
    %342 = vector.broadcast %cst_50 : f32 to vector<1x512xf32>
    %343 = arith.cmpf ogt, %265, %342 : vector<1x512xf32>
    %c497_i32_51 = arith.constant 497 : i32
    %344 = tpu.dynamic_rotate %119 by %c497_i32_51 dim 1 : vector<8x512xf32>, i32 -> vector<8x512xf32>
    %cst_52 = arith.constant -1.000000e+30 : f32
    %345 = vector.shape_cast %343 : vector<1x512xi1> to vector<1x512xi1>
    %346 = vector.broadcast %345 : vector<1x512xi1> to vector<8x512xi1>
    %347 = vector.broadcast %cst_52 : f32 to vector<8x512xf32>
    %348 = arith.select %346, %344, %347 : vector<8x512xi1>, vector<8x512xf32>
    %349 = arith.maximumf %341, %348 : vector<8x512xf32>
    %cst_53 = arith.constant 5.000000e-01 : f32
    %350 = vector.broadcast %cst_53 : f32 to vector<1x512xf32>
    %351 = arith.cmpf ogt, %270, %350 : vector<1x512xf32>
    %c496_i32_54 = arith.constant 496 : i32
    %352 = tpu.dynamic_rotate %119 by %c496_i32_54 dim 1 : vector<8x512xf32>, i32 -> vector<8x512xf32>
    %cst_55 = arith.constant -1.000000e+30 : f32
    %353 = vector.shape_cast %351 : vector<1x512xi1> to vector<1x512xi1>
    %354 = vector.broadcast %353 : vector<1x512xi1> to vector<8x512xi1>
    %355 = vector.broadcast %cst_55 : f32 to vector<8x512xf32>
    %356 = arith.select %354, %352, %355 : vector<8x512xi1>, vector<8x512xf32>
    %357 = arith.maximumf %349, %356 : vector<8x512xf32>
    %cst_56 = arith.constant 5.000000e-01 : f32
    %358 = vector.broadcast %cst_56 : f32 to vector<1x512xf32>
    %359 = arith.cmpf ogt, %275, %358 : vector<1x512xf32>
    %c495_i32_57 = arith.constant 495 : i32
    %360 = tpu.dynamic_rotate %119 by %c495_i32_57 dim 1 : vector<8x512xf32>, i32 -> vector<8x512xf32>
    %cst_58 = arith.constant -1.000000e+30 : f32
    %361 = vector.shape_cast %359 : vector<1x512xi1> to vector<1x512xi1>
    %362 = vector.broadcast %361 : vector<1x512xi1> to vector<8x512xi1>
    %363 = vector.broadcast %cst_58 : f32 to vector<8x512xf32>
    %364 = arith.select %362, %360, %363 : vector<8x512xi1>, vector<8x512xf32>
    %365 = arith.maximumf %357, %364 : vector<8x512xf32>
    %cst_59 = arith.constant dense<0.000000e+00> : vector<8xf32>
    %366 = vector.multi_reduction <add>, %365, %cst_59 [1] : vector<8x512xf32> to vector<8xf32>
    %367 = vector.shape_cast %366 : vector<8xf32> to vector<8x1xf32>
    %368 = arith.mulf %365, %365 : vector<8x512xf32>
    %cst_60 = arith.constant dense<0.000000e+00> : vector<8xf32>
    %369 = vector.multi_reduction <add>, %368, %cst_60 [1] : vector<8x512xf32> to vector<8xf32>
    %370 = vector.shape_cast %369 : vector<8xf32> to vector<8x1xf32>
    %cst_61 = arith.constant 0.001953125 : f32
    %371 = vector.broadcast %cst_61 : f32 to vector<8x1xf32>
    %372 = arith.mulf %367, %371 : vector<8x1xf32>
    %cst_62 = arith.constant 0.001953125 : f32
    %373 = vector.broadcast %cst_62 : f32 to vector<8x1xf32>
    %374 = arith.mulf %370, %373 : vector<8x1xf32>
    %375 = arith.mulf %372, %372 : vector<8x1xf32>
    %376 = arith.subf %374, %375 : vector<8x1xf32>
    %cst_63 = arith.constant 0.000000e+00 : f32
    %377 = vector.broadcast %cst_63 : f32 to vector<8x1xf32>
    %378 = arith.maximumf %376, %377 : vector<8x1xf32>
    %379 = vector.broadcast %372 : vector<8x1xf32> to vector<8x512xf32>
    %380 = arith.subf %365, %379 : vector<8x512xf32>
    %cst_64 = arith.constant 9.99999974E-6 : f32
    %381 = vector.broadcast %cst_64 : f32 to vector<8x1xf32>
    %382 = arith.addf %378, %381 : vector<8x1xf32>
    %383 = math.rsqrt %382 : vector<8x1xf32>
    %384 = vector.broadcast %383 : vector<8x1xf32> to vector<8x512xf32>
    %385 = arith.mulf %380, %384 : vector<8x512xf32>
    %386 = arith.addf %385, %238 : vector<8x512xf32>
    %c17_i32_65 = arith.constant 17 : i32
    %387 = tpu.dynamic_rotate %301 by %c17_i32_65 dim 1 : vector<8x512xf32>, i32 -> vector<8x512xf32>
    %cst_66 = arith.constant -1.000000e+30 : f32
    %388 = vector.shape_cast %303 : vector<1x512xi1> to vector<1x512xi1>
    %389 = vector.broadcast %388 : vector<1x512xi1> to vector<8x512xi1>
    %390 = vector.broadcast %cst_66 : f32 to vector<8x512xf32>
    %391 = arith.select %389, %387, %390 : vector<8x512xi1>, vector<8x512xf32>
    %c16_i32_67 = arith.constant 16 : i32
    %392 = tpu.dynamic_rotate %301 by %c16_i32_67 dim 1 : vector<8x512xf32>, i32 -> vector<8x512xf32>
    %cst_68 = arith.constant -1.000000e+30 : f32
    %393 = vector.shape_cast %310 : vector<1x512xi1> to vector<1x512xi1>
    %394 = vector.broadcast %393 : vector<1x512xi1> to vector<8x512xi1>
    %395 = vector.broadcast %cst_68 : f32 to vector<8x512xf32>
    %396 = arith.select %394, %392, %395 : vector<8x512xi1>, vector<8x512xf32>
    %397 = arith.maximumf %391, %396 : vector<8x512xf32>
    %c15_i32_69 = arith.constant 15 : i32
    %398 = tpu.dynamic_rotate %301 by %c15_i32_69 dim 1 : vector<8x512xf32>, i32 -> vector<8x512xf32>
    %cst_70 = arith.constant -1.000000e+30 : f32
    %399 = vector.shape_cast %318 : vector<1x512xi1> to vector<1x512xi1>
    %400 = vector.broadcast %399 : vector<1x512xi1> to vector<8x512xi1>
    %401 = vector.broadcast %cst_70 : f32 to vector<8x512xf32>
    %402 = arith.select %400, %398, %401 : vector<8x512xi1>, vector<8x512xf32>
    %403 = arith.maximumf %397, %402 : vector<8x512xf32>
    %c1_i32_71 = arith.constant 1 : i32
    %404 = tpu.dynamic_rotate %301 by %c1_i32_71 dim 1 : vector<8x512xf32>, i32 -> vector<8x512xf32>
    %cst_72 = arith.constant -1.000000e+30 : f32
    %405 = vector.shape_cast %326 : vector<1x512xi1> to vector<1x512xi1>
    %406 = vector.broadcast %405 : vector<1x512xi1> to vector<8x512xi1>
    %407 = vector.broadcast %cst_72 : f32 to vector<8x512xf32>
    %408 = arith.select %406, %404, %407 : vector<8x512xi1>, vector<8x512xf32>
    %409 = arith.maximumf %403, %408 : vector<8x512xf32>
    %410 = arith.maximumf %409, %301 : vector<8x512xf32>
    %c511_i32_73 = arith.constant 511 : i32
    %411 = tpu.dynamic_rotate %301 by %c511_i32_73 dim 1 : vector<8x512xf32>, i32 -> vector<8x512xf32>
    %cst_74 = arith.constant -1.000000e+30 : f32
    %412 = vector.shape_cast %335 : vector<1x512xi1> to vector<1x512xi1>
    %413 = vector.broadcast %412 : vector<1x512xi1> to vector<8x512xi1>
    %414 = vector.broadcast %cst_74 : f32 to vector<8x512xf32>
    %415 = arith.select %413, %411, %414 : vector<8x512xi1>, vector<8x512xf32>
    %416 = arith.maximumf %410, %415 : vector<8x512xf32>
    %c497_i32_75 = arith.constant 497 : i32
    %417 = tpu.dynamic_rotate %301 by %c497_i32_75 dim 1 : vector<8x512xf32>, i32 -> vector<8x512xf32>
    %cst_76 = arith.constant -1.000000e+30 : f32
    %418 = vector.shape_cast %343 : vector<1x512xi1> to vector<1x512xi1>
    %419 = vector.broadcast %418 : vector<1x512xi1> to vector<8x512xi1>
    %420 = vector.broadcast %cst_76 : f32 to vector<8x512xf32>
    %421 = arith.select %419, %417, %420 : vector<8x512xi1>, vector<8x512xf32>
    %422 = arith.maximumf %416, %421 : vector<8x512xf32>
    %c496_i32_77 = arith.constant 496 : i32
    %423 = tpu.dynamic_rotate %301 by %c496_i32_77 dim 1 : vector<8x512xf32>, i32 -> vector<8x512xf32>
    %cst_78 = arith.constant -1.000000e+30 : f32
    %424 = vector.shape_cast %351 : vector<1x512xi1> to vector<1x512xi1>
    %425 = vector.broadcast %424 : vector<1x512xi1> to vector<8x512xi1>
    %426 = vector.broadcast %cst_78 : f32 to vector<8x512xf32>
    %427 = arith.select %425, %423, %426 : vector<8x512xi1>, vector<8x512xf32>
    %428 = arith.maximumf %422, %427 : vector<8x512xf32>
    %c495_i32_79 = arith.constant 495 : i32
    %429 = tpu.dynamic_rotate %301 by %c495_i32_79 dim 1 : vector<8x512xf32>, i32 -> vector<8x512xf32>
    %cst_80 = arith.constant -1.000000e+30 : f32
    %430 = vector.shape_cast %359 : vector<1x512xi1> to vector<1x512xi1>
    %431 = vector.broadcast %430 : vector<1x512xi1> to vector<8x512xi1>
    %432 = vector.broadcast %cst_80 : f32 to vector<8x512xf32>
    %433 = arith.select %431, %429, %432 : vector<8x512xi1>, vector<8x512xf32>
    %434 = arith.maximumf %428, %433 : vector<8x512xf32>
    %cst_81 = arith.constant dense<0.000000e+00> : vector<8xf32>
    %435 = vector.multi_reduction <add>, %434, %cst_81 [1] : vector<8x512xf32> to vector<8xf32>
    %436 = vector.shape_cast %435 : vector<8xf32> to vector<8x1xf32>
    %437 = arith.mulf %434, %434 : vector<8x512xf32>
    %cst_82 = arith.constant dense<0.000000e+00> : vector<8xf32>
    %438 = vector.multi_reduction <add>, %437, %cst_82 [1] : vector<8x512xf32> to vector<8xf32>
    %439 = vector.shape_cast %438 : vector<8xf32> to vector<8x1xf32>
    %cst_83 = arith.constant 0.001953125 : f32
    %440 = vector.broadcast %cst_83 : f32 to vector<8x1xf32>
    %441 = arith.mulf %436, %440 : vector<8x1xf32>
    %cst_84 = arith.constant 0.001953125 : f32
    %442 = vector.broadcast %cst_84 : f32 to vector<8x1xf32>
    %443 = arith.mulf %439, %442 : vector<8x1xf32>
    %444 = arith.mulf %441, %441 : vector<8x1xf32>
    %445 = arith.subf %443, %444 : vector<8x1xf32>
    %cst_85 = arith.constant 0.000000e+00 : f32
    %446 = vector.broadcast %cst_85 : f32 to vector<8x1xf32>
    %447 = arith.maximumf %445, %446 : vector<8x1xf32>
    %448 = vector.broadcast %441 : vector<8x1xf32> to vector<8x512xf32>
    %449 = arith.subf %434, %448 : vector<8x512xf32>
    %cst_86 = arith.constant 9.99999974E-6 : f32
    %450 = vector.broadcast %cst_86 : f32 to vector<8x1xf32>
    %451 = arith.addf %447, %450 : vector<8x1xf32>
    %452 = math.rsqrt %451 : vector<8x1xf32>
    %453 = vector.broadcast %452 : vector<8x1xf32> to vector<8x512xf32>
    %454 = arith.mulf %449, %453 : vector<8x512xf32>
    %455 = arith.addf %386, %454 : vector<8x512xf32>
    %456 = vector.extract_strided_slice %301 {offsets = [0, 0], sizes = [8, 256], strides = [1, 1]} : vector<8x512xf32> to vector<8x256xf32>
    %c0_87 = arith.constant 0 : index
    %c0_88 = arith.constant 0 : index
    %457 = vector.load %arg4[%c0_87, %c0_88] : memref<32x256xf32, #tpu.memory_space<vmem>>, vector<8x256xf32>
    tpu.vector_store %arg4[%c0_87, %c0_88], %456 {strides = array<i32>} : memref<32x256xf32, #tpu.memory_space<vmem>>, vector<8x256xf32>,
    %458 = vector.extract_strided_slice %455 {offsets = [0, 0], sizes = [8, 256], strides = [1, 1]} : vector<8x512xf32> to vector<8x256xf32>
    %c8_89 = arith.constant 8 : index
    %c0_90 = arith.constant 0 : index
    %459 = vector.load %arg4[%c8_89, %c0_90] : memref<32x256xf32, #tpu.memory_space<vmem>>, vector<8x256xf32>
    tpu.vector_store %arg4[%c8_89, %c0_90], %458 {strides = array<i32>} : memref<32x256xf32, #tpu.memory_space<vmem>>, vector<8x256xf32>,
    %460 = vector.extract_strided_slice %301 {offsets = [0, 256], sizes = [8, 256], strides = [1, 1]} : vector<8x512xf32> to vector<8x256xf32>
    %c16 = arith.constant 16 : index
    %c0_91 = arith.constant 0 : index
    %461 = vector.load %arg4[%c16, %c0_91] : memref<32x256xf32, #tpu.memory_space<vmem>>, vector<8x256xf32>
    tpu.vector_store %arg4[%c16, %c0_91], %460 {strides = array<i32>} : memref<32x256xf32, #tpu.memory_space<vmem>>, vector<8x256xf32>,
    %462 = vector.extract_strided_slice %455 {offsets = [0, 256], sizes = [8, 256], strides = [1, 1]} : vector<8x512xf32> to vector<8x256xf32>
    %c24 = arith.constant 24 : index
    %c0_92 = arith.constant 0 : index
    %463 = vector.load %arg4[%c24, %c0_92] : memref<32x256xf32, #tpu.memory_space<vmem>>, vector<8x256xf32>
    tpu.vector_store %arg4[%c24, %c0_92], %462 {strides = array<i32>} : memref<32x256xf32, #tpu.memory_space<vmem>>, vector<8x256xf32>,
    return
  }
}

</mosaic_0001>

<llo_original>
// kernel: fwd.1
$region0: #{fwd.1}
  #allocation0 [shape = 'u32[]', space=smem, size = 0x4, offset = 0x4, fixed_abs, tag = 'smem constant byte address 0x4 - core index']
  #allocation1 [shape = 'u32[144,128]{1,0:T(1,128)}', space=vmem, size = 0x12000, scoped, tag = 'internal scratch']
  %s0 = inlined_call_operand.vmem [shape: f32[16,256], index: 0, kind: input, shape index: {}]
  %s1 = inlined_call_operand.vmem [shape: f32[16,256], index: 1, kind: input, shape index: {}]
  %s2 = inlined_call_operand.vmem [shape: f32[9,512], index: 2, kind: input, shape index: {}]
  %s3 = inlined_call_operand.vmem [shape: f32[8,256], index: 3, kind: input, shape index: {}]
  %s4 = inlined_call_operand.vmem [shape: f32[32,256], index: 4, kind: output, shape index: {}]
  %s5 = sld [smem:[#allocation0]]
  $region26: #{fwd.1} parent=0
    _
  %s7 = ssub.s32 1, %s5
  %s8 = scalar_select 0, %s7, %s5
  // Predicated region
  $region2: #{fwd.1} parent=0 // pred_check
    _
  $region3: #{fwd.1} parent=0 // pred_check_branch
    %10 = sbr.rel (0) target = $region5
  $region4: #{fwd.1} parent=0 // pred_region
    _
  $region5: #{fwd.1} parent=0 // pred_fallthru
    _
  // Predicated region
  $region6: #{fwd.1} parent=0 // pred_check
    _
  $region7: #{fwd.1} parent=0 // pred_check_branch
    %12 = sbr.rel (0) target = $region9
  $region8: #{fwd.1} parent=0 // pred_region
    _
  $region9: #{fwd.1} parent=0 // pred_fallthru
    _
  // Predicated region
  $region10: #{fwd.1} parent=0 // pred_check
    _
  $region11: #{fwd.1} parent=0 // pred_check_branch
    %14 = sbr.rel (0) target = $region13
  $region12: #{fwd.1} parent=0 // pred_region
    _
  $region13: #{fwd.1} parent=0 // pred_fallthru
    _
  // Predicated region
  $region14: #{fwd.1} parent=0 // pred_check
    _
  $region15: #{fwd.1} parent=0 // pred_check_branch
    %16 = sbr.rel (0) target = $region17
  $region16: #{fwd.1} parent=0 // pred_region
    _
  $region17: #{fwd.1} parent=0 // pred_fallthru
    _
  %v17 = vld [vmem:[%s2] ss:$8 sm:$0xf]
  %v18 = vld [vmem:[%s0] sm:$0xff]
  %v19 = vld [vmem:[%s0 + $0x8] sm:$0xff]
  %v20 = vld [vmem:[%s0 + $0x10] sm:$0xff]
  %v21 = vld [vmem:[%s0 + $0x18] sm:$0xff]
  %v22 = vmax.f32 %v18, 0.0
  %v23 = vmax.f32 %v19, 0.0
  %v24 = vmax.f32 %v20, 0.0
  %v25 = vmax.f32 %v21, 0.0
  %v26 = vld [vmem:[%s3] sm:$0xff]
  %28 = vset.pattern.permute.xlu0 0
  %29 = vperm.xlu0 %28, %v26
  %v30 = vpop.permute.xlu0 %29
  %v32 = vlaneseq
  %v33 = vshrl.u32 %v32, 7
  %v34 = vsub.s32 0, %v33
  %v35 = vrot.slane %v22, %v34
  %v36 = vlaneseq
  %v37 = vshrl.u32 %v36, 7
  %v38 = vsub.s32 0, %v37
  %v39 = vrot.slane %v23, %v38
  %v40 = vmul.f32 %v30, %v35
  %v41 = vmul.f32 %v30, %v39
  %42 = vset.pattern.permute.xlu0 1
  %43 = vperm.xlu0 %42, %v26
  %v44 = vpop.permute.xlu0 %43
  %v46 = vlaneseq
  %v47 = vshrl.u32 %v46, 7
  %v48 = vsub.s32 1, %v47
  %v49 = vrot.slane %v22, %v48
  %v50 = vlaneseq
  %v51 = vshrl.u32 %v50, 7
  %v52 = vsub.s32 1, %v51
  %v53 = vrot.slane %v23, %v52
  %v54 = vmul.f32 %v44, %v49
  %v55 = vmul.f32 %v44, %v53
  %v56 = vadd.f32 %v40, %v54
  %v57 = vadd.f32 %v41, %v55
  %58 = vset.pattern.permute.xlu0 2
  %59 = vperm.xlu0 %58, %v26
  %v60 = vpop.permute.xlu0 %59
  %v62 = vlaneseq
  %v63 = vshrl.u32 %v62, 7
  %v64 = vsub.s32 2, %v63
  %v65 = vrot.slane %v22, %v64
  %v66 = vlaneseq
  %v67 = vshrl.u32 %v66, 7
  %v68 = vsub.s32 2, %v67
  %v69 = vrot.slane %v23, %v68
  %v70 = vmul.f32 %v60, %v65
  %v71 = vmul.f32 %v60, %v69
  %v72 = vadd.f32 %v56, %v70
  %v73 = vadd.f32 %v57, %v71
  %74 = vset.pattern.permute.xlu0 3
  %75 = vperm.xlu0 %74, %v26
  %v76 = vpop.permute.xlu0 %75
  %v78 = vlaneseq
  %v79 = vshrl.u32 %v78, 7
  %v80 = vsub.s32 3, %v79
  %v81 = vrot.slane %v22, %v80
  %v82 = vlaneseq
  %v83 = vshrl.u32 %v82, 7
  %v84 = vsub.s32 3, %v83
  %v85 = vrot.slane %v23, %v84
  %v86 = vmul.f32 %v76, %v81
  %v87 = vmul.f32 %v76, %v85
  %v88 = vadd.f32 %v72, %v86
  %v89 = vadd.f32 %v73, %v87
  %90 = vset.pattern.permute.xlu0 4
  %91 = vperm.xlu0 %90, %v26
  %v92 = vpop.permute.xlu0 %91
  %v94 = vlaneseq
  %v95 = vshrl.u32 %v94, 7
  %v96 = vsub.s32 4, %v95
  %v97 = vrot.slane %v22, %v96
  %v98 = vlaneseq
  %v99 = vshrl.u32 %v98, 7
  %v100 = vsub.s32 4, %v99
  %v101 = vrot.slane %v23, %v100
  %v102 = vmul.f32 %v92, %v97
  %v103 = vmul.f32 %v92, %v101
  %v104 = vadd.f32 %v88, %v102
  %v105 = vadd.f32 %v89, %v103
  %106 = vset.pattern.permute.xlu0 5
  %107 = vperm.xlu0 %106, %v26
  %v108 = vpop.permute.xlu0 %107
  %v110 = vlaneseq
  %v111 = vshrl.u32 %v110, 7
  %v112 = vsub.s32 5, %v111
  %v113 = vrot.slane %v22, %v112
  %v114 = vlaneseq
  %v115 = vshrl.u32 %v114, 7
  %v116 = vsub.s32 5, %v115
  %v117 = vrot.slane %v23, %v116
  %v118 = vmul.f32 %v108, %v113
  %v119 = vmul.f32 %v108, %v117
  %v120 = vadd.f32 %v104, %v118
  %v121 = vadd.f32 %v105, %v119
  %122 = vset.pattern.permute.xlu0 6
  %123 = vperm.xlu0 %122, %v26
  %v124 = vpop.permute.xlu0 %123
  %v126 = vlaneseq
  %v127 = vshrl.u32 %v126, 7
  %v128 = vsub.s32 6, %v127
  %v129 = vrot.slane %v22, %v128
  %v130 = vlaneseq
  %v131 = vshrl.u32 %v130, 7
  %v132 = vsub.s32 6, %v131
  %v133 = vrot.slane %v23, %v132
  %v134 = vmul.f32 %v124, %v129
  %v135 = vmul.f32 %v124, %v133
  %v136 = vadd.f32 %v120, %v134
  %v137 = vadd.f32 %v121, %v135
  %138 = vset.pattern.permute.xlu0 7
  %139 = vperm.xlu0 %138, %v26
  %v140 = vpop.permute.xlu0 %139
  %v142 = vlaneseq
  %v143 = vshrl.u32 %v142, 7
  %v144 = vsub.s32 7, %v143
  %v145 = vrot.slane %v22, %v144
  %v146 = vlaneseq
  %v147 = vshrl.u32 %v146, 7
  %v148 = vsub.s32 7, %v147
  %v149 = vrot.slane %v23, %v148
  %v150 = vmul.f32 %v140, %v145
  %v151 = vmul.f32 %v140, %v149
  %v152 = vadd.f32 %v136, %v150
  %v153 = vadd.f32 %v137, %v151
  %v154 = vlaneseq
  %v155 = vshrl.u32 %v154, 7
  %v156 = vsub.s32 0, %v155
  %v157 = vrot.slane %v24, %v156
  %v158 = vlaneseq
  %v159 = vshrl.u32 %v158, 7
  %v160 = vsub.s32 0, %v159
  %v161 = vrot.slane %v25, %v160
  %v162 = vmul.f32 %v30, %v157
  %v163 = vmul.f32 %v30, %v161
  %v164 = vlaneseq
  %v165 = vshrl.u32 %v164, 7
  %v166 = vsub.s32 1, %v165
  %v167 = vrot.slane %v24, %v166
  %v168 = vlaneseq
  %v169 = vshrl.u32 %v168, 7
  %v170 = vsub.s32 1, %v169
  %v171 = vrot.slane %v25, %v170
  %v172 = vmul.f32 %v44, %v167
  %v173 = vmul.f32 %v44, %v171
  %v174 = vadd.f32 %v162, %v172
  %v175 = vadd.f32 %v163, %v173
  %v176 = vlaneseq
  %v177 = vshrl.u32 %v176, 7
  %v178 = vsub.s32 2, %v177
  %v179 = vrot.slane %v24, %v178
  %v180 = vlaneseq
  %v181 = vshrl.u32 %v180, 7
  %v182 = vsub.s32 2, %v181
  %v183 = vrot.slane %v25, %v182
  %v184 = vmul.f32 %v60, %v179
  %v185 = vmul.f32 %v60, %v183
  %v186 = vadd.f32 %v174, %v184
  %v187 = vadd.f32 %v175, %v185
  %v188 = vlaneseq
  %v189 = vshrl.u32 %v188, 7
  %v190 = vsub.s32 3, %v189
  %v191 = vrot.slane %v24, %v190
  %v192 = vlaneseq
  %v193 = vshrl.u32 %v192, 7
  %v194 = vsub.s32 3, %v193
  %v195 = vrot.slane %v25, %v194
  %v196 = vmul.f32 %v76, %v191
  %v197 = vmul.f32 %v76, %v195
  %v198 = vadd.f32 %v186, %v196
  %v199 = vadd.f32 %v187, %v197
  %v200 = vlaneseq
  %v201 = vshrl.u32 %v200, 7
  %v202 = vsub.s32 4, %v201
  %v203 = vrot.slane %v24, %v202
  %v204 = vlaneseq
  %v205 = vshrl.u32 %v204, 7
  %v206 = vsub.s32 4, %v205
  %v207 = vrot.slane %v25, %v206
  %v208 = vmul.f32 %v92, %v203
  %v209 = vmul.f32 %v92, %v207
  %v210 = vadd.f32 %v198, %v208
  %v211 = vadd.f32 %v199, %v209
  %v212 = vlaneseq
  %v213 = vshrl.u32 %v212, 7
  %v214 = vsub.s32 5, %v213
  %v215 = vrot.slane %v24, %v214
  %v216 = vlaneseq
  %v217 = vshrl.u32 %v216, 7
  %v218 = vsub.s32 5, %v217
  %v219 = vrot.slane %v25, %v218
  %v220 = vmul.f32 %v108, %v215
  %v221 = vmul.f32 %v108, %v219
  %v222 = vadd.f32 %v210, %v220
  %v223 = vadd.f32 %v211, %v221
  %v224 = vlaneseq
  %v225 = vshrl.u32 %v224, 7
  %v226 = vsub.s32 6, %v225
  %v227 = vrot.slane %v24, %v226
  %v228 = vlaneseq
  %v229 = vshrl.u32 %v228, 7
  %v230 = vsub.s32 6, %v229
  %v231 = vrot.slane %v25, %v230
  %v232 = vmul.f32 %v124, %v227
  %v233 = vmul.f32 %v124, %v231
  %v234 = vadd.f32 %v222, %v232
  %v235 = vadd.f32 %v223, %v233
  %v236 = vlaneseq
  %v237 = vshrl.u32 %v236, 7
  %v238 = vsub.s32 7, %v237
  %v239 = vrot.slane %v24, %v238
  %v240 = vlaneseq
  %v241 = vshrl.u32 %v240, 7
  %v242 = vsub.s32 7, %v241
  %v243 = vrot.slane %v25, %v242
  %v244 = vmul.f32 %v140, %v239
  %v245 = vmul.f32 %v140, %v243
  %v246 = vadd.f32 %v234, %v244
  %v247 = vadd.f32 %v235, %v245
  %v248 = vadd.f32 %v152, %v153
  %v249 = vadd.f32 %v248, %v246
  %v250 = vadd.f32 %v249, %v247
  %251 = vadd.xlane.f32.xlu0 %v250
  %v252 = vpop.xlane.xlu0 %251
  %v253 = vmul.f32 %v152, %v152
  %v254 = vmul.f32 %v153, %v153
  %v255 = vmul.f32 %v246, %v246
  %v256 = vmul.f32 %v247, %v247
  %v257 = vadd.f32 %v253, %v254
  %v258 = vadd.f32 %v257, %v255
  %v259 = vadd.f32 %v258, %v256
  %260 = vadd.xlane.f32.xlu0 %v259
  %v261 = vpop.xlane.xlu0 %260
  %v262 = vmul.f32 %v252, 0.001953125
  %v263 = vmul.f32 %v261, 0.001953125
  %v264 = vmul.f32 %v262, %v262
  %v265 = vsub.f32 %v263, %v264
  %v266 = vmax.f32 %v265, 0.0
  %v267 = vsub.f32 %v152, %v262
  %v268 = vsub.f32 %v153, %v262
  %v269 = vsub.f32 %v246, %v262
  %v270 = vsub.f32 %v247, %v262
  %v271 = vadd.f32 %v266, 1e-05
  %v272 = vrsqrt.pop %v271
  %v273 = vmul.f32 %v267, %v272
  %v274 = vmul.f32 %v268, %v272
  %v275 = vmul.f32 %v269, %v272
  %v276 = vmul.f32 %v270, %v272
  %v277 = vld [vmem:[%s1] sm:$0xff]
  %v278 = vld [vmem:[%s1 + $0x8] sm:$0xff]
  %v279 = vld [vmem:[%s1 + $0x10] sm:$0xff]
  %v280 = vld [vmem:[%s1 + $0x18] sm:$0xff]
  %v281 = vmax.f32 %v277, 0.0
  %v282 = vmax.f32 %v278, 0.0
  %v283 = vmax.f32 %v279, 0.0
  %v284 = vmax.f32 %v280, 0.0
  %v285 = vld [vmem:[%s3 + $0x8] sm:$0xff]
  %287 = vset.pattern.permute.xlu0 0
  %288 = vperm.xlu0 %287, %v285
  %v289 = vpop.permute.xlu0 %288
  %v291 = vlaneseq
  %v292 = vshrl.u32 %v291, 7
  %v293 = vsub.s32 0, %v292
  %v294 = vrot.slane %v281, %v293
  %v295 = vlaneseq
  %v296 = vshrl.u32 %v295, 7
  %v297 = vsub.s32 0, %v296
  %v298 = vrot.slane %v282, %v297
  %v299 = vmul.f32 %v289, %v294
  %v300 = vmul.f32 %v289, %v298
  %301 = vset.pattern.permute.xlu0 1
  %302 = vperm.xlu0 %301, %v285
  %v303 = vpop.permute.xlu0 %302
  %v305 = vlaneseq
  %v306 = vshrl.u32 %v305, 7
  %v307 = vsub.s32 1, %v306
  %v308 = vrot.slane %v281, %v307
  %v309 = vlaneseq
  %v310 = vshrl.u32 %v309, 7
  %v311 = vsub.s32 1, %v310
  %v312 = vrot.slane %v282, %v311
  %v313 = vmul.f32 %v303, %v308
  %v314 = vmul.f32 %v303, %v312
  %v315 = vadd.f32 %v299, %v313
  %v316 = vadd.f32 %v300, %v314
  %317 = vset.pattern.permute.xlu0 2
  %318 = vperm.xlu0 %317, %v285
  %v319 = vpop.permute.xlu0 %318
  %v321 = vlaneseq
  %v322 = vshrl.u32 %v321, 7
  %v323 = vsub.s32 2, %v322
  %v324 = vrot.slane %v281, %v323
  %v325 = vlaneseq
  %v326 = vshrl.u32 %v325, 7
  %v327 = vsub.s32 2, %v326
  %v328 = vrot.slane %v282, %v327
  %v329 = vmul.f32 %v319, %v324
  %v330 = vmul.f32 %v319, %v328
  %v331 = vadd.f32 %v315, %v329
  %v332 = vadd.f32 %v316, %v330
  %333 = vset.pattern.permute.xlu0 3
  %334 = vperm.xlu0 %333, %v285
  %v335 = vpop.permute.xlu0 %334
  %v337 = vlaneseq
  %v338 = vshrl.u32 %v337, 7
  %v339 = vsub.s32 3, %v338
  %v340 = vrot.slane %v281, %v339
  %v341 = vlaneseq
  %v342 = vshrl.u32 %v341, 7
  %v343 = vsub.s32 3, %v342
  %v344 = vrot.slane %v282, %v343
  %v345 = vmul.f32 %v335, %v340
  %v346 = vmul.f32 %v335, %v344
  %v347 = vadd.f32 %v331, %v345
  %v348 = vadd.f32 %v332, %v346
  %349 = vset.pattern.permute.xlu0 4
  %350 = vperm.xlu0 %349, %v285
  %v351 = vpop.permute.xlu0 %350
  %v353 = vlaneseq
  %v354 = vshrl.u32 %v353, 7
  %v355 = vsub.s32 4, %v354
  %v356 = vrot.slane %v281, %v355
  %v357 = vlaneseq
  %v358 = vshrl.u32 %v357, 7
  %v359 = vsub.s32 4, %v358
  %v360 = vrot.slane %v282, %v359
  %v361 = vmul.f32 %v351, %v356
  %v362 = vmul.f32 %v351, %v360
  %v363 = vadd.f32 %v347, %v361
  %v364 = vadd.f32 %v348, %v362
  %365 = vset.pattern.permute.xlu0 5
  %366 = vperm.xlu0 %365, %v285
  %v367 = vpop.permute.xlu0 %366
  %v369 = vlaneseq
  %v370 = vshrl.u32 %v369, 7
  %v371 = vsub.s32 5, %v370
  %v372 = vrot.slane %v281, %v371
  %v373 = vlaneseq
  %v374 = vshrl.u32 %v373, 7
  %v375 = vsub.s32 5, %v374
  %v376 = vrot.slane %v282, %v375
  %v377 = vmul.f32 %v367, %v372
  %v378 = vmul.f32 %v367, %v376
  %v379 = vadd.f32 %v363, %v377
  %v380 = vadd.f32 %v364, %v378
  %381 = vset.pattern.permute.xlu0 6
  %382 = vperm.xlu0 %381, %v285
  %v383 = vpop.permute.xlu0 %382
  %v385 = vlaneseq
  %v386 = vshrl.u32 %v385, 7
  %v387 = vsub.s32 6, %v386
  %v388 = vrot.slane %v281, %v387
  %v389 = vlaneseq
  %v390 = vshrl.u32 %v389, 7
  %v391 = vsub.s32 6, %v390
  %v392 = vrot.slane %v282, %v391
  %v393 = vmul.f32 %v383, %v388
  %v394 = vmul.f32 %v383, %v392
  %v395 = vadd.f32 %v379, %v393
  %v396 = vadd.f32 %v380, %v394
  %397 = vset.pattern.permute.xlu0 7
  %398 = vperm.xlu0 %397, %v285
  %v399 = vpop.permute.xlu0 %398
  %v401 = vlaneseq
  %v402 = vshrl.u32 %v401, 7
  %v403 = vsub.s32 7, %v402
  %v404 = vrot.slane %v281, %v403
  %v405 = vlaneseq
  %v406 = vshrl.u32 %v405, 7
  %v407 = vsub.s32 7, %v406
  %v408 = vrot.slane %v282, %v407
  %v409 = vmul.f32 %v399, %v404
  %v410 = vmul.f32 %v399, %v408
  %v411 = vadd.f32 %v395, %v409
  %v412 = vadd.f32 %v396, %v410
  %v413 = vlaneseq
  %v414 = vshrl.u32 %v413, 7
  %v415 = vsub.s32 0, %v414
  %v416 = vrot.slane %v283, %v415
  %v417 = vlaneseq
  %v418 = vshrl.u32 %v417, 7
  %v419 = vsub.s32 0, %v418
  %v420 = vrot.slane %v284, %v419
  %v421 = vmul.f32 %v289, %v416
  %v422 = vmul.f32 %v289, %v420
  %v423 = vlaneseq
  %v424 = vshrl.u32 %v423, 7
  %v425 = vsub.s32 1, %v424
  %v426 = vrot.slane %v283, %v425
  %v427 = vlaneseq
  %v428 = vshrl.u32 %v427, 7
  %v429 = vsub.s32 1, %v428
  %v430 = vrot.slane %v284, %v429
  %v431 = vmul.f32 %v303, %v426
  %v432 = vmul.f32 %v303, %v430
  %v433 = vadd.f32 %v421, %v431
  %v434 = vadd.f32 %v422, %v432
  %v435 = vlaneseq
  %v436 = vshrl.u32 %v435, 7
  %v437 = vsub.s32 2, %v436
  %v438 = vrot.slane %v283, %v437
  %v439 = vlaneseq
  %v440 = vshrl.u32 %v439, 7
  %v441 = vsub.s32 2, %v440
  %v442 = vrot.slane %v284, %v441
  %v443 = vmul.f32 %v319, %v438
  %v444 = vmul.f32 %v319, %v442
  %v445 = vadd.f32 %v433, %v443
  %v446 = vadd.f32 %v434, %v444
  %v447 = vlaneseq
  %v448 = vshrl.u32 %v447, 7
  %v449 = vsub.s32 3, %v448
  %v450 = vrot.slane %v283, %v449
  %v451 = vlaneseq
  %v452 = vshrl.u32 %v451, 7
  %v453 = vsub.s32 3, %v452
  %v454 = vrot.slane %v284, %v453
  %v455 = vmul.f32 %v335, %v450
  %v456 = vmul.f32 %v335, %v454
  %v457 = vadd.f32 %v445, %v455
  %v458 = vadd.f32 %v446, %v456
  %v459 = vlaneseq
  %v460 = vshrl.u32 %v459, 7
  %v461 = vsub.s32 4, %v460
  %v462 = vrot.slane %v283, %v461
  %v463 = vlaneseq
  %v464 = vshrl.u32 %v463, 7
  %v465 = vsub.s32 4, %v464
  %v466 = vrot.slane %v284, %v465
  %v467 = vmul.f32 %v351, %v462
  %v468 = vmul.f32 %v351, %v466
  %v469 = vadd.f32 %v457, %v467
  %v470 = vadd.f32 %v458, %v468
  %v471 = vlaneseq
  %v472 = vshrl.u32 %v471, 7
  %v473 = vsub.s32 5, %v472
  %v474 = vrot.slane %v283, %v473
  %v475 = vlaneseq
  %v476 = vshrl.u32 %v475, 7
  %v477 = vsub.s32 5, %v476
  %v478 = vrot.slane %v284, %v477
  %v479 = vmul.f32 %v367, %v474
  %v480 = vmul.f32 %v367, %v478
  %v481 = vadd.f32 %v469, %v479
  %v482 = vadd.f32 %v470, %v480
  %v483 = vlaneseq
  %v484 = vshrl.u32 %v483, 7
  %v485 = vsub.s32 6, %v484
  %v486 = vrot.slane %v283, %v485
  %v487 = vlaneseq
  %v488 = vshrl.u32 %v487, 7
  %v489 = vsub.s32 6, %v488
  %v490 = vrot.slane %v284, %v489
  %v491 = vmul.f32 %v383, %v486
  %v492 = vmul.f32 %v383, %v490
  %v493 = vadd.f32 %v481, %v491
  %v494 = vadd.f32 %v482, %v492
  %v495 = vlaneseq
  %v496 = vshrl.u32 %v495, 7
  %v497 = vsub.s32 7, %v496
  %v498 = vrot.slane %v283, %v497
  %v499 = vlaneseq
  %v500 = vshrl.u32 %v499, 7
  %v501 = vsub.s32 7, %v500
  %v502 = vrot.slane %v284, %v501
  %v503 = vmul.f32 %v399, %v498
  %v504 = vmul.f32 %v399, %v502
  %v505 = vadd.f32 %v493, %v503
  %v506 = vadd.f32 %v494, %v504
  %v507 = vadd.f32 %v411, %v412
  %v508 = vadd.f32 %v507, %v505
  %v509 = vadd.f32 %v508, %v506
  %510 = vadd.xlane.f32.xlu0 %v509
  %v511 = vpop.xlane.xlu0 %510
  %v512 = vmul.f32 %v411, %v411
  %v513 = vmul.f32 %v412, %v412
  %v514 = vmul.f32 %v505, %v505
  %v515 = vmul.f32 %v506, %v506
  %v516 = vadd.f32 %v512, %v513
  %v517 = vadd.f32 %v516, %v514
  %v518 = vadd.f32 %v517, %v515
  %519 = vadd.xlane.f32.xlu0 %v518
  %v520 = vpop.xlane.xlu0 %519
  %v521 = vmul.f32 %v511, 0.001953125
  %v522 = vmul.f32 %v520, 0.001953125
  %v523 = vmul.f32 %v521, %v521
  %v524 = vsub.f32 %v522, %v523
  %v525 = vmax.f32 %v524, 0.0
  %v526 = vsub.f32 %v411, %v521
  %v527 = vsub.f32 %v412, %v521
  %v528 = vsub.f32 %v505, %v521
  %v529 = vsub.f32 %v506, %v521
  %v530 = vadd.f32 %v525, 1e-05
  %v531 = vrsqrt.pop %v530
  %v532 = vmul.f32 %v526, %v531
  %v533 = vmul.f32 %v527, %v531
  %v534 = vmul.f32 %v528, %v531
  %v535 = vmul.f32 %v529, %v531
  %536 = vrot.lane.b32.xlu0 %v273, 17
  %v537 = vpop.permute.xlu0 %536
  %538 = vrot.lane.b32.xlu0 %v274, 17
  %v539 = vpop.permute.xlu0 %538
  %540 = vrot.lane.b32.xlu0 %v275, 17
  %v541 = vpop.permute.xlu0 %540
  %542 = vrot.lane.b32.xlu0 %v276, 17
  %v543 = vpop.permute.xlu0 %542
  %v544 = vlaneseq
  %v545 = vand.u32 %v544, 127
  %vm546 = vcmp.lt.s32.totalorder %v545, 17
  %v547 = vsel %vm546, %v541, %v543
  %v548 = vsel %vm546, %v539, %v541
  %v549 = vsel %vm546, %v537, %v539
  %v550 = vsel %vm546, %v543, %v537
  %s551 = scalar_lea.vmem %s2, 1
  %v552 = vld [vmem:[%s551] ss:$8 sm:$0xf]
  %v554 = vlaneseq
  %v555 = vshrl.u32 %v554, 7
  %v556 = vsub.s32 0, %v555
  %v557 = vrot.slane %v552, %v556
  %v558 = vlaneseq
  %v559 = vshrl.u32 %v558, 7
  %v560 = vsub.s32 1, %v559
  %v561 = vrot.slane %v552, %v560
  %v562 = vlaneseq
  %v563 = vshrl.u32 %v562, 7
  %v564 = vsub.s32 2, %v563
  %v565 = vrot.slane %v552, %v564
  %v566 = vlaneseq
  %v567 = vshrl.u32 %v566, 7
  %v568 = vsub.s32 3, %v567
  %v569 = vrot.slane %v552, %v568
  %v574 = vmul.f32 %v550, %v557
  %v575 = vmul.f32 %v549, %v561
  %v576 = vmul.f32 %v548, %v565
  %v577 = vmul.f32 %v547, %v569
  %578 = vrot.lane.b32.xlu0 %v273, 16
  %v579 = vpop.permute.xlu0 %578
  %580 = vrot.lane.b32.xlu0 %v274, 16
  %v581 = vpop.permute.xlu0 %580
  %582 = vrot.lane.b32.xlu0 %v275, 16
  %v583 = vpop.permute.xlu0 %582
  %584 = vrot.lane.b32.xlu0 %v276, 16
  %v585 = vpop.permute.xlu0 %584
  %vm586 = vcmp.lt.s32.totalorder %v545, 16
  %v587 = vsel %vm586, %v583, %v585
  %v588 = vsel %vm586, %v581, %v583
  %v589 = vsel %vm586, %v579, %v581
  %v590 = vsel %vm586, %v585, %v579
  %s591 = scalar_lea.vmem %s2, 2
  %v592 = vld [vmem:[%s591] ss:$8 sm:$0xf]
  %v594 = vlaneseq
  %v595 = vshrl.u32 %v594, 7
  %v596 = vsub.s32 0, %v595
  %v597 = vrot.slane %v592, %v596
  %v598 = vlaneseq
  %v599 = vshrl.u32 %v598, 7
  %v600 = vsub.s32 1, %v599
  %v601 = vrot.slane %v592, %v600
  %v602 = vlaneseq
  %v603 = vshrl.u32 %v602, 7
  %v604 = vsub.s32 2, %v603
  %v605 = vrot.slane %v592, %v604
  %v606 = vlaneseq
  %v607 = vshrl.u32 %v606, 7
  %v608 = vsub.s32 3, %v607
  %v609 = vrot.slane %v592, %v608
  %v614 = vmul.f32 %v590, %v597
  %v615 = vmul.f32 %v589, %v601
  %v616 = vmul.f32 %v588, %v605
  %v617 = vmul.f32 %v587, %v609
  %v618 = vadd.f32 %v574, %v614
  %v619 = vadd.f32 %v575, %v615
  %v620 = vadd.f32 %v576, %v616
  %v621 = vadd.f32 %v577, %v617
  %622 = vrot.lane.b32.xlu0 %v273, 15
  %v623 = vpop.permute.xlu0 %622
  %624 = vrot.lane.b32.xlu0 %v274, 15
  %v625 = vpop.permute.xlu0 %624
  %626 = vrot.lane.b32.xlu0 %v275, 15
  %v627 = vpop.permute.xlu0 %626
  %628 = vrot.lane.b32.xlu0 %v276, 15
  %v629 = vpop.permute.xlu0 %628
  %vm630 = vcmp.lt.s32.totalorder %v545, 15
  %v631 = vsel %vm630, %v627, %v629
  %v632 = vsel %vm630, %v625, %v627
  %v633 = vsel %vm630, %v623, %v625
  %v634 = vsel %vm630, %v629, %v623
  %s635 = scalar_lea.vmem %s2, 3
  %v636 = vld [vmem:[%s635] ss:$8 sm:$0xf]
  %v638 = vlaneseq
  %v639 = vshrl.u32 %v638, 7
  %v640 = vsub.s32 0, %v639
  %v641 = vrot.slane %v636, %v640
  %v642 = vlaneseq
  %v643 = vshrl.u32 %v642, 7
  %v644 = vsub.s32 1, %v643
  %v645 = vrot.slane %v636, %v644
  %v646 = vlaneseq
  %v647 = vshrl.u32 %v646, 7
  %v648 = vsub.s32 2, %v647
  %v649 = vrot.slane %v636, %v648
  %v650 = vlaneseq
  %v651 = vshrl.u32 %v650, 7
  %v652 = vsub.s32 3, %v651
  %v653 = vrot.slane %v636, %v652
  %v658 = vmul.f32 %v634, %v641
  %v659 = vmul.f32 %v633, %v645
  %v660 = vmul.f32 %v632, %v649
  %v661 = vmul.f32 %v631, %v653
  %v662 = vadd.f32 %v618, %v658
  %v663 = vadd.f32 %v619, %v659
  %v664 = vadd.f32 %v620, %v660
  %v665 = vadd.f32 %v621, %v661
  %666 = vrot.lane.b32.xlu0 %v273, 1
  %v667 = vpop.permute.xlu0 %666
  %668 = vrot.lane.b32.xlu0 %v274, 1
  %v669 = vpop.permute.xlu0 %668
  %670 = vrot.lane.b32.xlu0 %v275, 1
  %v671 = vpop.permute.xlu0 %670
  %672 = vrot.lane.b32.xlu0 %v276, 1
  %v673 = vpop.permute.xlu0 %672
  %vm674 = vcmp.lt.s32.totalorder %v545, 1
  %v675 = vsel %vm674, %v671, %v673
  %v676 = vsel %vm674, %v669, %v671
  %v677 = vsel %vm674, %v667, %v669
  %v678 = vsel %vm674, %v673, %v667
  %s679 = scalar_lea.vmem %s2, 4
  %v680 = vld [vmem:[%s679] ss:$8 sm:$0xf]
  %v682 = vlaneseq
  %v683 = vshrl.u32 %v682, 7
  %v684 = vsub.s32 0, %v683
  %v685 = vrot.slane %v680, %v684
  %v686 = vlaneseq
  %v687 = vshrl.u32 %v686, 7
  %v688 = vsub.s32 1, %v687
  %v689 = vrot.slane %v680, %v688
  %v690 = vlaneseq
  %v691 = vshrl.u32 %v690, 7
  %v692 = vsub.s32 2, %v691
  %v693 = vrot.slane %v680, %v692
  %v694 = vlaneseq
  %v695 = vshrl.u32 %v694, 7
  %v696 = vsub.s32 3, %v695
  %v697 = vrot.slane %v680, %v696
  %v702 = vmul.f32 %v678, %v685
  %v703 = vmul.f32 %v677, %v689
  %v704 = vmul.f32 %v676, %v693
  %v705 = vmul.f32 %v675, %v697
  %v706 = vadd.f32 %v662, %v702
  %v707 = vadd.f32 %v663, %v703
  %v708 = vadd.f32 %v664, %v704
  %v709 = vadd.f32 %v665, %v705
  %v710 = vadd.f32 %v706, %v273
  %v711 = vadd.f32 %v707, %v274
  %v712 = vadd.f32 %v708, %v275
  %v713 = vadd.f32 %v709, %v276
  %714 = vrot.lane.b32.xlu0 %v273, 127
  %v715 = vpop.permute.xlu0 %714
  %716 = vrot.lane.b32.xlu0 %v274, 127
  %v717 = vpop.permute.xlu0 %716
  %718 = vrot.lane.b32.xlu0 %v275, 127
  %v719 = vpop.permute.xlu0 %718
  %720 = vrot.lane.b32.xlu0 %v276, 127
  %v721 = vpop.permute.xlu0 %720
  %vm722 = vcmp.lt.s32.totalorder %v545, 127
  %v723 = vsel %vm722, %v719, %v721
  %v724 = vsel %vm722, %v717, %v719
  %v725 = vsel %vm722, %v715, %v717
  %v726 = vsel %vm722, %v721, %v715
  %s727 = scalar_lea.vmem %s2, 5
  %v728 = vld [vmem:[%s727] ss:$8 sm:$0xf]
  %v730 = vlaneseq
  %v731 = vshrl.u32 %v730, 7
  %v732 = vsub.s32 0, %v731
  %v733 = vrot.slane %v728, %v732
  %v734 = vlaneseq
  %v735 = vshrl.u32 %v734, 7
  %v736 = vsub.s32 1, %v735
  %v737 = vrot.slane %v728, %v736
  %v738 = vlaneseq
  %v739 = vshrl.u32 %v738, 7
  %v740 = vsub.s32 2, %v739
  %v741 = vrot.slane %v728, %v740
  %v742 = vlaneseq
  %v743 = vshrl.u32 %v742, 7
  %v744 = vsub.s32 3, %v743
  %v745 = vrot.slane %v728, %v744
  %v750 = vmul.f32 %v725, %v733
  %v751 = vmul.f32 %v724, %v737
  %v752 = vmul.f32 %v723, %v741
  %v753 = vmul.f32 %v726, %v745
  %v754 = vadd.f32 %v710, %v750
  %v755 = vadd.f32 %v711, %v751
  %v756 = vadd.f32 %v712, %v752
  %v757 = vadd.f32 %v713, %v753
  %758 = vrot.lane.b32.xlu0 %v273, 113
  %v759 = vpop.permute.xlu0 %758
  %760 = vrot.lane.b32.xlu0 %v274, 113
  %v761 = vpop.permute.xlu0 %760
  %762 = vrot.lane.b32.xlu0 %v275, 113
  %v763 = vpop.permute.xlu0 %762
  %764 = vrot.lane.b32.xlu0 %v276, 113
  %v765 = vpop.permute.xlu0 %764
  %vm766 = vcmp.lt.s32.totalorder %v545, 113
  %v767 = vsel %vm766, %v763, %v765
  %v768 = vsel %vm766, %v761, %v763
  %v769 = vsel %vm766, %v759, %v761
  %v770 = vsel %vm766, %v765, %v759
  %s771 = scalar_lea.vmem %s2, 6
  %v772 = vld [vmem:[%s771] ss:$8 sm:$0xf]
  %v774 = vlaneseq
  %v775 = vshrl.u32 %v774, 7
  %v776 = vsub.s32 0, %v775
  %v777 = vrot.slane %v772, %v776
  %v778 = vlaneseq
  %v779 = vshrl.u32 %v778, 7
  %v780 = vsub.s32 1, %v779
  %v781 = vrot.slane %v772, %v780
  %v782 = vlaneseq
  %v783 = vshrl.u32 %v782, 7
  %v784 = vsub.s32 2, %v783
  %v785 = vrot.slane %v772, %v784
  %v786 = vlaneseq
  %v787 = vshrl.u32 %v786, 7
  %v788 = vsub.s32 3, %v787
  %v789 = vrot.slane %v772, %v788
  %v794 = vmul.f32 %v769, %v777
  %v795 = vmul.f32 %v768, %v781
  %v796 = vmul.f32 %v767, %v785
  %v797 = vmul.f32 %v770, %v789
  %v798 = vadd.f32 %v754, %v794
  %v799 = vadd.f32 %v755, %v795
  %v800 = vadd.f32 %v756, %v796
  %v801 = vadd.f32 %v757, %v797
  %802 = vrot.lane.b32.xlu0 %v273, 112
  %v803 = vpop.permute.xlu0 %802
  %804 = vrot.lane.b32.xlu0 %v274, 112
  %v805 = vpop.permute.xlu0 %804
  %806 = vrot.lane.b32.xlu0 %v275, 112
  %v807 = vpop.permute.xlu0 %806
  %808 = vrot.lane.b32.xlu0 %v276, 112
  %v809 = vpop.permute.xlu0 %808
  %vm810 = vcmp.lt.s32.totalorder %v545, 112
  %v811 = vsel %vm810, %v807, %v809
  %v812 = vsel %vm810, %v805, %v807
  %v813 = vsel %vm810, %v803, %v805
  %v814 = vsel %vm810, %v809, %v803
  %s815 = scalar_lea.vmem %s2, 7
  %v816 = vld [vmem:[%s815] ss:$8 sm:$0xf]
  %v818 = vlaneseq
  %v819 = vshrl.u32 %v818, 7
  %v820 = vsub.s32 0, %v819
  %v821 = vrot.slane %v816, %v820
  %v822 = vlaneseq
  %v823 = vshrl.u32 %v822, 7
  %v824 = vsub.s32 1, %v823
  %v825 = vrot.slane %v816, %v824
  %v826 = vlaneseq
  %v827 = vshrl.u32 %v826, 7
  %v828 = vsub.s32 2, %v827
  %v829 = vrot.slane %v816, %v828
  %v830 = vlaneseq
  %v831 = vshrl.u32 %v830, 7
  %v832 = vsub.s32 3, %v831
  %v833 = vrot.slane %v816, %v832
  %v838 = vmul.f32 %v813, %v821
  %v839 = vmul.f32 %v812, %v825
  %v840 = vmul.f32 %v811, %v829
  %v841 = vmul.f32 %v814, %v833
  %v842 = vadd.f32 %v798, %v838
  %v843 = vadd.f32 %v799, %v839
  %v844 = vadd.f32 %v800, %v840
  %v845 = vadd.f32 %v801, %v841
  %846 = vrot.lane.b32.xlu0 %v273, 111
  %v847 = vpop.permute.xlu0 %846
  %848 = vrot.lane.b32.xlu0 %v274, 111
  %v849 = vpop.permute.xlu0 %848
  %850 = vrot.lane.b32.xlu0 %v275, 111
  %v851 = vpop.permute.xlu0 %850
  %852 = vrot.lane.b32.xlu0 %v276, 111
  %v853 = vpop.permute.xlu0 %852
  %vm854 = vcmp.lt.s32.totalorder %v545, 111
  %v855 = vsel %vm854, %v851, %v853
  %v856 = vsel %vm854, %v849, %v851
  %v857 = vsel %vm854, %v847, %v849
  %v858 = vsel %vm854, %v853, %v847
  %s859 = scalar_lea.vmem %s2, 32
  %v860 = vld [vmem:[%s859] ss:$8 sm:$0xf]
  %v862 = vlaneseq
  %v863 = vshrl.u32 %v862, 7
  %v864 = vsub.s32 0, %v863
  %v865 = vrot.slane %v860, %v864
  %v866 = vlaneseq
  %v867 = vshrl.u32 %v866, 7
  %v868 = vsub.s32 1, %v867
  %v869 = vrot.slane %v860, %v868
  %v870 = vlaneseq
  %v871 = vshrl.u32 %v870, 7
  %v872 = vsub.s32 2, %v871
  %v873 = vrot.slane %v860, %v872
  %v874 = vlaneseq
  %v875 = vshrl.u32 %v874, 7
  %v876 = vsub.s32 3, %v875
  %v877 = vrot.slane %v860, %v876
  %v882 = vmul.f32 %v857, %v865
  %v883 = vmul.f32 %v856, %v869
  %v884 = vmul.f32 %v855, %v873
  %v885 = vmul.f32 %v858, %v877
  %v886 = vadd.f32 %v842, %v882
  %v887 = vadd.f32 %v843, %v883
  %v888 = vadd.f32 %v844, %v884
  %v889 = vadd.f32 %v845, %v885
  %v891 = vlaneseq
  %v892 = vshrl.u32 %v891, 7
  %v893 = vsub.s32 0, %v892
  %v894 = vrot.slane %v17, %v893
  %v895 = vlaneseq
  %v896 = vshrl.u32 %v895, 7
  %v897 = vsub.s32 1, %v896
  %v898 = vrot.slane %v17, %v897
  %v899 = vlaneseq
  %v900 = vshrl.u32 %v899, 7
  %v901 = vsub.s32 2, %v900
  %v902 = vrot.slane %v17, %v901
  %v903 = vlaneseq
  %v904 = vshrl.u32 %v903, 7
  %v905 = vsub.s32 3, %v904
  %v906 = vrot.slane %v17, %v905
  %v911 = vmul.f32 %v886, %v894
  %v912 = vmul.f32 %v887, %v898
  %v913 = vmul.f32 %v888, %v902
  %v914 = vmul.f32 %v889, %v906
  %v915 = vadd.f32 %v911, %v912
  %v916 = vadd.f32 %v915, %v913
  %v917 = vadd.f32 %v916, %v914
  %918 = vadd.xlane.f32.xlu0 %v917
  %v919 = vpop.xlane.xlu0 %918
  %v920 = vmul.f32 %v911, %v911
  %v921 = vmul.f32 %v912, %v912
  %v922 = vmul.f32 %v913, %v913
  %v923 = vmul.f32 %v914, %v914
  %v924 = vadd.f32 %v920, %v921
  %v925 = vadd.f32 %v924, %v922
  %v926 = vadd.f32 %v925, %v923
  %927 = vadd.xlane.f32.xlu0 %v926
  %v928 = vpop.xlane.xlu0 %927
  %v929 = vmul.f32 %v919, 0.001953125
  %v930 = vmul.f32 %v928, 0.001953125
  %v931 = vmul.f32 %v929, %v929
  %v932 = vsub.f32 %v930, %v931
  %v933 = vmax.f32 %v932, 0.0
  %v934 = vsub.f32 %v911, %v929
  %v935 = vsub.f32 %v912, %v929
  %v936 = vsub.f32 %v913, %v929
  %v937 = vsub.f32 %v914, %v929
  %v938 = vadd.f32 %v933, 1e-05
  %v939 = vrsqrt.pop %v938
  %v940 = vmul.f32 %v934, %v939
  %v941 = vmul.f32 %v935, %v939
  %v942 = vmul.f32 %v936, %v939
  %v943 = vmul.f32 %v937, %v939
  %v944 = vadd.f32 %v940, %v532
  %v945 = vadd.f32 %v941, %v533
  %v946 = vadd.f32 %v942, %v534
  %v947 = vadd.f32 %v943, %v535
  %vm948 = vcmp.gt.f32.partialorder %v552, 0.5
  %v949 = vsel %vm948, 1, 0
  %v950 = vlaneseq
  %v951 = vshrl.u32 %v950, 7
  %v952 = vsub.s32 0, %v951
  %v953 = vrot.slane %v949, %v952
  %v954 = vlaneseq
  %v955 = vshrl.u32 %v954, 7
  %v956 = vsub.s32 1, %v955
  %v957 = vrot.slane %v949, %v956
  %v958 = vlaneseq
  %v959 = vshrl.u32 %v958, 7
  %v960 = vsub.s32 2, %v959
  %v961 = vrot.slane %v949, %v960
  %v962 = vlaneseq
  %v963 = vshrl.u32 %v962, 7
  %v964 = vsub.s32 3, %v963
  %v965 = vrot.slane %v949, %v964
  %vm966 = vcmp.eq.s32.totalorder %v953, 1
  %vm967 = vcmp.eq.s32.totalorder %v957, 1
  %vm968 = vcmp.eq.s32.totalorder %v961, 1
  %vm969 = vcmp.eq.s32.totalorder %v965, 1
  %v970 = vsel %vm966, %v550, -1e+30
  %v971 = vsel %vm967, %v549, -1e+30
  %v972 = vsel %vm968, %v548, -1e+30
  %v973 = vsel %vm969, %v547, -1e+30
  %vm974 = vcmp.gt.f32.partialorder %v592, 0.5
  %v975 = vsel %vm974, 1, 0
  %v976 = vlaneseq
  %v977 = vshrl.u32 %v976, 7
  %v978 = vsub.s32 0, %v977
  %v979 = vrot.slane %v975, %v978
  %v980 = vlaneseq
  %v981 = vshrl.u32 %v980, 7
  %v982 = vsub.s32 1, %v981
  %v983 = vrot.slane %v975, %v982
  %v984 = vlaneseq
  %v985 = vshrl.u32 %v984, 7
  %v986 = vsub.s32 2, %v985
  %v987 = vrot.slane %v975, %v986
  %v988 = vlaneseq
  %v989 = vshrl.u32 %v988, 7
  %v990 = vsub.s32 3, %v989
  %v991 = vrot.slane %v975, %v990
  %vm992 = vcmp.eq.s32.totalorder %v979, 1
  %vm993 = vcmp.eq.s32.totalorder %v983, 1
  %vm994 = vcmp.eq.s32.totalorder %v987, 1
  %vm995 = vcmp.eq.s32.totalorder %v991, 1
  %v996 = vsel %vm992, %v590, -1e+30
  %v997 = vsel %vm993, %v589, -1e+30
  %v998 = vsel %vm994, %v588, -1e+30
  %v999 = vsel %vm995, %v587, -1e+30
  %v1000 = vmax.f32 %v970, %v996
  %v1001 = vmax.f32 %v971, %v997
  %v1002 = vmax.f32 %v972, %v998
  %v1003 = vmax.f32 %v973, %v999
  %vm1004 = vcmp.gt.f32.partialorder %v636, 0.5
  %v1005 = vsel %vm1004, 1, 0
  %v1006 = vlaneseq
  %v1007 = vshrl.u32 %v1006, 7
  %v1008 = vsub.s32 0, %v1007
  %v1009 = vrot.slane %v1005, %v1008
  %v1010 = vlaneseq
  %v1011 = vshrl.u32 %v1010, 7
  %v1012 = vsub.s32 1, %v1011
  %v1013 = vrot.slane %v1005, %v1012
  %v1014 = vlaneseq
  %v1015 = vshrl.u32 %v1014, 7
  %v1016 = vsub.s32 2, %v1015
  %v1017 = vrot.slane %v1005, %v1016
  %v1018 = vlaneseq
  %v1019 = vshrl.u32 %v1018, 7
  %v1020 = vsub.s32 3, %v1019
  %v1021 = vrot.slane %v1005, %v1020
  %vm1022 = vcmp.eq.s32.totalorder %v1009, 1
  %vm1023 = vcmp.eq.s32.totalorder %v1013, 1
  %vm1024 = vcmp.eq.s32.totalorder %v1017, 1
  %vm1025 = vcmp.eq.s32.totalorder %v1021, 1
  %v1026 = vsel %vm1022, %v634, -1e+30
  %v1027 = vsel %vm1023, %v633, -1e+30
  %v1028 = vsel %vm1024, %v632, -1e+30
  %v1029 = vsel %vm1025, %v631, -1e+30
  %v1030 = vmax.f32 %v1000, %v1026
  %v1031 = vmax.f32 %v1001, %v1027
  %v1032 = vmax.f32 %v1002, %v1028
  %v1033 = vmax.f32 %v1003, %v1029
  %vm1034 = vcmp.gt.f32.partialorder %v680, 0.5
  %v1035 = vsel %vm1034, 1, 0
  %v1036 = vlaneseq
  %v1037 = vshrl.u32 %v1036, 7
  %v1038 = vsub.s32 0, %v1037
  %v1039 = vrot.slane %v1035, %v1038
  %v1040 = vlaneseq
  %v1041 = vshrl.u32 %v1040, 7
  %v1042 = vsub.s32 1, %v1041
  %v1043 = vrot.slane %v1035, %v1042
  %v1044 = vlaneseq
  %v1045 = vshrl.u32 %v1044, 7
  %v1046 = vsub.s32 2, %v1045
  %v1047 = vrot.slane %v1035, %v1046
  %v1048 = vlaneseq
  %v1049 = vshrl.u32 %v1048, 7
  %v1050 = vsub.s32 3, %v1049
  %v1051 = vrot.slane %v1035, %v1050
  %vm1052 = vcmp.eq.s32.totalorder %v1039, 1
  %vm1053 = vcmp.eq.s32.totalorder %v1043, 1
  %vm1054 = vcmp.eq.s32.totalorder %v1047, 1
  %vm1055 = vcmp.eq.s32.totalorder %v1051, 1
  %v1056 = vsel %vm1052, %v678, -1e+30
  %v1057 = vsel %vm1053, %v677, -1e+30
  %v1058 = vsel %vm1054, %v676, -1e+30
  %v1059 = vsel %vm1055, %v675, -1e+30
  %v1060 = vmax.f32 %v1030, %v1056
  %v1061 = vmax.f32 %v1031, %v1057
  %v1062 = vmax.f32 %v1032, %v1058
  %v1063 = vmax.f32 %v1033, %v1059
  %v1064 = vmax.f32 %v1060, %v273
  %v1065 = vmax.f32 %v1061, %v274
  %v1066 = vmax.f32 %v1062, %v275
  %v1067 = vmax.f32 %v1063, %v276
  %vm1068 = vcmp.gt.f32.partialorder %v728, 0.5
  %v1069 = vsel %vm1068, 1, 0
  %v1070 = vlaneseq
  %v1071 = vshrl.u32 %v1070, 7
  %v1072 = vsub.s32 0, %v1071
  %v1073 = vrot.slane %v1069, %v1072
  %v1074 = vlaneseq
  %v1075 = vshrl.u32 %v1074, 7
  %v1076 = vsub.s32 1, %v1075
  %v1077 = vrot.slane %v1069, %v1076
  %v1078 = vlaneseq
  %v1079 = vshrl.u32 %v1078, 7
  %v1080 = vsub.s32 2, %v1079
  %v1081 = vrot.slane %v1069, %v1080
  %v1082 = vlaneseq
  %v1083 = vshrl.u32 %v1082, 7
  %v1084 = vsub.s32 3, %v1083
  %v1085 = vrot.slane %v1069, %v1084
  %vm1086 = vcmp.eq.s32.totalorder %v1073, 1
  %vm1087 = vcmp.eq.s32.totalorder %v1077, 1
  %vm1088 = vcmp.eq.s32.totalorder %v1081, 1
  %vm1089 = vcmp.eq.s32.totalorder %v1085, 1
  %v1090 = vsel %vm1086, %v725, -1e+30
  %v1091 = vsel %vm1087, %v724, -1e+30
  %v1092 = vsel %vm1088, %v723, -1e+30
  %v1093 = vsel %vm1089, %v726, -1e+30
  %v1094 = vmax.f32 %v1064, %v1090
  %v1095 = vmax.f32 %v1065, %v1091
  %v1096 = vmax.f32 %v1066, %v1092
  %v1097 = vmax.f32 %v1067, %v1093
  %vm1098 = vcmp.gt.f32.partialorder %v772, 0.5
  %v1099 = vsel %vm1098, 1, 0
  %v1100 = vlaneseq
  %v1101 = vshrl.u32 %v1100, 7
  %v1102 = vsub.s32 0, %v1101
  %v1103 = vrot.slane %v1099, %v1102
  %v1104 = vlaneseq
  %v1105 = vshrl.u32 %v1104, 7
  %v1106 = vsub.s32 1, %v1105
  %v1107 = vrot.slane %v1099, %v1106
  %v1108 = vlaneseq
  %v1109 = vshrl.u32 %v1108, 7
  %v1110 = vsub.s32 2, %v1109
  %v1111 = vrot.slane %v1099, %v1110
  %v1112 = vlaneseq
  %v1113 = vshrl.u32 %v1112, 7
  %v1114 = vsub.s32 3, %v1113
  %v1115 = vrot.slane %v1099, %v1114
  %vm1116 = vcmp.eq.s32.totalorder %v1103, 1
  %vm1117 = vcmp.eq.s32.totalorder %v1107, 1
  %vm1118 = vcmp.eq.s32.totalorder %v1111, 1
  %vm1119 = vcmp.eq.s32.totalorder %v1115, 1
  %v1120 = vsel %vm1116, %v769, -1e+30
  %v1121 = vsel %vm1117, %v768, -1e+30
  %v1122 = vsel %vm1118, %v767, -1e+30
  %v1123 = vsel %vm1119, %v770, -1e+30
  %v1124 = vmax.f32 %v1094, %v1120
  %v1125 = vmax.f32 %v1095, %v1121
  %v1126 = vmax.f32 %v1096, %v1122
  %v1127 = vmax.f32 %v1097, %v1123
  %vm1128 = vcmp.gt.f32.partialorder %v816, 0.5
  %v1129 = vsel %vm1128, 1, 0
  %v1130 = vlaneseq
  %v1131 = vshrl.u32 %v1130, 7
  %v1132 = vsub.s32 0, %v1131
  %v1133 = vrot.slane %v1129, %v1132
  %v1134 = vlaneseq
  %v1135 = vshrl.u32 %v1134, 7
  %v1136 = vsub.s32 1, %v1135
  %v1137 = vrot.slane %v1129, %v1136
  %v1138 = vlaneseq
  %v1139 = vshrl.u32 %v1138, 7
  %v1140 = vsub.s32 2, %v1139
  %v1141 = vrot.slane %v1129, %v1140
  %v1142 = vlaneseq
  %v1143 = vshrl.u32 %v1142, 7
  %v1144 = vsub.s32 3, %v1143
  %v1145 = vrot.slane %v1129, %v1144
  %vm1146 = vcmp.eq.s32.totalorder %v1133, 1
  %vm1147 = vcmp.eq.s32.totalorder %v1137, 1
  %vm1148 = vcmp.eq.s32.totalorder %v1141, 1
  %vm1149 = vcmp.eq.s32.totalorder %v1145, 1
  %v1150 = vsel %vm1146, %v813, -1e+30
  %v1151 = vsel %vm1147, %v812, -1e+30
  %v1152 = vsel %vm1148, %v811, -1e+30
  %v1153 = vsel %vm1149, %v814, -1e+30
  %v1154 = vmax.f32 %v1124, %v1150
  %v1155 = vmax.f32 %v1125, %v1151
  %v1156 = vmax.f32 %v1126, %v1152
  %v1157 = vmax.f32 %v1127, %v1153
  %vm1158 = vcmp.gt.f32.partialorder %v860, 0.5
  %v1159 = vsel %vm1158, 1, 0
  %v1160 = vlaneseq
  %v1161 = vshrl.u32 %v1160, 7
  %v1162 = vsub.s32 0, %v1161
  %v1163 = vrot.slane %v1159, %v1162
  %v1164 = vlaneseq
  %v1165 = vshrl.u32 %v1164, 7
  %v1166 = vsub.s32 1, %v1165
  %v1167 = vrot.slane %v1159, %v1166
  %v1168 = vlaneseq
  %v1169 = vshrl.u32 %v1168, 7
  %v1170 = vsub.s32 2, %v1169
  %v1171 = vrot.slane %v1159, %v1170
  %v1172 = vlaneseq
  %v1173 = vshrl.u32 %v1172, 7
  %v1174 = vsub.s32 3, %v1173
  %v1175 = vrot.slane %v1159, %v1174
  %vm1176 = vcmp.eq.s32.totalorder %v1163, 1
  %vm1177 = vcmp.eq.s32.totalorder %v1167, 1
  %vm1178 = vcmp.eq.s32.totalorder %v1171, 1
  %vm1179 = vcmp.eq.s32.totalorder %v1175, 1
  %v1180 = vsel %vm1176, %v857, -1e+30
  %v1181 = vsel %vm1177, %v856, -1e+30
  %v1182 = vsel %vm1178, %v855, -1e+30
  %v1183 = vsel %vm1179, %v858, -1e+30
  %v1184 = vmax.f32 %v1154, %v1180
  %v1185 = vmax.f32 %v1155, %v1181
  %v1186 = vmax.f32 %v1156, %v1182
  %v1187 = vmax.f32 %v1157, %v1183
  %v1188 = vadd.f32 %v1184, %v1185
  %v1189 = vadd.f32 %v1188, %v1186
  %v1190 = vadd.f32 %v1189, %v1187
  %1191 = vadd.xlane.f32.xlu0 %v1190
  %v1192 = vpop.xlane.xlu0 %1191
  %v1193 = vmul.f32 %v1184, %v1184
  %v1194 = vmul.f32 %v1185, %v1185
  %v1195 = vmul.f32 %v1186, %v1186
  %v1196 = vmul.f32 %v1187, %v1187
  %v1197 = vadd.f32 %v1193, %v1194
  %v1198 = vadd.f32 %v1197, %v1195
  %v1199 = vadd.f32 %v1198, %v1196
  %1200 = vadd.xlane.f32.xlu0 %v1199
  %v1201 = vpop.xlane.xlu0 %1200
  %v1202 = vmul.f32 %v1192, 0.001953125
  %v1203 = vmul.f32 %v1201, 0.001953125
  %v1204 = vmul.f32 %v1202, %v1202
  %v1205 = vsub.f32 %v1203, %v1204
  %v1206 = vmax.f32 %v1205, 0.0
  %v1207 = vsub.f32 %v1184, %v1202
  %v1208 = vsub.f32 %v1185, %v1202
  %v1209 = vsub.f32 %v1186, %v1202
  %v1210 = vsub.f32 %v1187, %v1202
  %v1211 = vadd.f32 %v1206, 1e-05
  %v1212 = vrsqrt.pop %v1211
  %v1213 = vmul.f32 %v1207, %v1212
  %v1214 = vmul.f32 %v1208, %v1212
  %v1215 = vmul.f32 %v1209, %v1212
  %v1216 = vmul.f32 %v1210, %v1212
  %v1217 = vadd.f32 %v1213, %v532
  %v1218 = vadd.f32 %v1214, %v533
  %v1219 = vadd.f32 %v1215, %v534
  %v1220 = vadd.f32 %v1216, %v535
  %1221 = vrot.lane.b32.xlu0 %v944, 17
  %v1222 = vpop.permute.xlu0 %1221
  %1223 = vrot.lane.b32.xlu0 %v945, 17
  %v1224 = vpop.permute.xlu0 %1223
  %1225 = vrot.lane.b32.xlu0 %v946, 17
  %v1226 = vpop.permute.xlu0 %1225
  %1227 = vrot.lane.b32.xlu0 %v947, 17
  %v1228 = vpop.permute.xlu0 %1227
  %v1229 = vsel %vm546, %v1226, %v1228
  %v1230 = vsel %vm546, %v1224, %v1226
  %v1231 = vsel %vm546, %v1222, %v1224
  %v1232 = vsel %vm546, %v1228, %v1222
  %v1233 = vsel %vm966, %v1232, -1e+30
  %v1234 = vsel %vm967, %v1231, -1e+30
  %v1235 = vsel %vm968, %v1230, -1e+30
  %v1236 = vsel %vm969, %v1229, -1e+30
  %1237 = vrot.lane.b32.xlu0 %v944, 16
  %v1238 = vpop.permute.xlu0 %1237
  %1239 = vrot.lane.b32.xlu0 %v945, 16
  %v1240 = vpop.permute.xlu0 %1239
  %1241 = vrot.lane.b32.xlu0 %v946, 16
  %v1242 = vpop.permute.xlu0 %1241
  %1243 = vrot.lane.b32.xlu0 %v947, 16
  %v1244 = vpop.permute.xlu0 %1243
  %v1245 = vsel %vm586, %v1242, %v1244
  %v1246 = vsel %vm586, %v1240, %v1242
  %v1247 = vsel %vm586, %v1238, %v1240
  %v1248 = vsel %vm586, %v1244, %v1238
  %v1249 = vsel %vm992, %v1248, -1e+30
  %v1250 = vsel %vm993, %v1247, -1e+30
  %v1251 = vsel %vm994, %v1246, -1e+30
  %v1252 = vsel %vm995, %v1245, -1e+30
  %v1253 = vmax.f32 %v1233, %v1249
  %v1254 = vmax.f32 %v1234, %v1250
  %v1255 = vmax.f32 %v1235, %v1251
  %v1256 = vmax.f32 %v1236, %v1252
  %1257 = vrot.lane.b32.xlu0 %v944, 15
  %v1258 = vpop.permute.xlu0 %1257
  %1259 = vrot.lane.b32.xlu0 %v945, 15
  %v1260 = vpop.permute.xlu0 %1259
  %1261 = vrot.lane.b32.xlu0 %v946, 15
  %v1262 = vpop.permute.xlu0 %1261
  %1263 = vrot.lane.b32.xlu0 %v947, 15
  %v1264 = vpop.permute.xlu0 %1263
  %v1265 = vsel %vm630, %v1262, %v1264
  %v1266 = vsel %vm630, %v1260, %v1262
  %v1267 = vsel %vm630, %v1258, %v1260
  %v1268 = vsel %vm630, %v1264, %v1258
  %v1269 = vsel %vm1022, %v1268, -1e+30
  %v1270 = vsel %vm1023, %v1267, -1e+30
  %v1271 = vsel %vm1024, %v1266, -1e+30
  %v1272 = vsel %vm1025, %v1265, -1e+30
  %v1273 = vmax.f32 %v1253, %v1269
  %v1274 = vmax.f32 %v1254, %v1270
  %v1275 = vmax.f32 %v1255, %v1271
  %v1276 = vmax.f32 %v1256, %v1272
  %1277 = vrot.lane.b32.xlu0 %v944, 1
  %v1278 = vpop.permute.xlu0 %1277
  %1279 = vrot.lane.b32.xlu0 %v945, 1
  %v1280 = vpop.permute.xlu0 %1279
  %1281 = vrot.lane.b32.xlu0 %v946, 1
  %v1282 = vpop.permute.xlu0 %1281
  %1283 = vrot.lane.b32.xlu0 %v947, 1
  %v1284 = vpop.permute.xlu0 %1283
  %v1285 = vsel %vm674, %v1282, %v1284
  %v1286 = vsel %vm674, %v1280, %v1282
  %v1287 = vsel %vm674, %v1278, %v1280
  %v1288 = vsel %vm674, %v1284, %v1278
  %v1289 = vsel %vm1052, %v1288, -1e+30
  %v1290 = vsel %vm1053, %v1287, -1e+30
  %v1291 = vsel %vm1054, %v1286, -1e+30
  %v1292 = vsel %vm1055, %v1285, -1e+30
  %v1293 = vmax.f32 %v1273, %v1289
  %v1294 = vmax.f32 %v1274, %v1290
  %v1295 = vmax.f32 %v1275, %v1291
  %v1296 = vmax.f32 %v1276, %v1292
  %v1297 = vmax.f32 %v1293, %v944
  %v1298 = vmax.f32 %v1294, %v945
  %v1299 = vmax.f32 %v1295, %v946
  %v1300 = vmax.f32 %v1296, %v947
  %1301 = vrot.lane.b32.xlu0 %v944, 127
  %v1302 = vpop.permute.xlu0 %1301
  %1303 = vrot.lane.b32.xlu0 %v945, 127
  %v1304 = vpop.permute.xlu0 %1303
  %1305 = vrot.lane.b32.xlu0 %v946, 127
  %v1306 = vpop.permute.xlu0 %1305
  %1307 = vrot.lane.b32.xlu0 %v947, 127
  %v1308 = vpop.permute.xlu0 %1307
  %v1309 = vsel %vm722, %v1306, %v1308
  %v1310 = vsel %vm722, %v1304, %v1306
  %v1311 = vsel %vm722, %v1302, %v1304
  %v1312 = vsel %vm722, %v1308, %v1302
  %v1313 = vsel %vm1086, %v1311, -1e+30
  %v1314 = vsel %vm1087, %v1310, -1e+30
  %v1315 = vsel %vm1088, %v1309, -1e+30
  %v1316 = vsel %vm1089, %v1312, -1e+30
  %v1317 = vmax.f32 %v1297, %v1313
  %v1318 = vmax.f32 %v1298, %v1314
  %v1319 = vmax.f32 %v1299, %v1315
  %v1320 = vmax.f32 %v1300, %v1316
  %1321 = vrot.lane.b32.xlu0 %v944, 113
  %v1322 = vpop.permute.xlu0 %1321
  %1323 = vrot.lane.b32.xlu0 %v945, 113
  %v1324 = vpop.permute.xlu0 %1323
  %1325 = vrot.lane.b32.xlu0 %v946, 113
  %v1326 = vpop.permute.xlu0 %1325
  %1327 = vrot.lane.b32.xlu0 %v947, 113
  %v1328 = vpop.permute.xlu0 %1327
  %v1329 = vsel %vm766, %v1326, %v1328
  %v1330 = vsel %vm766, %v1324, %v1326
  %v1331 = vsel %vm766, %v1322, %v1324
  %v1332 = vsel %vm766, %v1328, %v1322
  %v1333 = vsel %vm1116, %v1331, -1e+30
  %v1334 = vsel %vm1117, %v1330, -1e+30
  %v1335 = vsel %vm1118, %v1329, -1e+30
  %v1336 = vsel %vm1119, %v1332, -1e+30
  %v1337 = vmax.f32 %v1317, %v1333
  %v1338 = vmax.f32 %v1318, %v1334
  %v1339 = vmax.f32 %v1319, %v1335
  %v1340 = vmax.f32 %v1320, %v1336
  %1341 = vrot.lane.b32.xlu0 %v944, 112
  %v1342 = vpop.permute.xlu0 %1341
  %1343 = vrot.lane.b32.xlu0 %v945, 112
  %v1344 = vpop.permute.xlu0 %1343
  %1345 = vrot.lane.b32.xlu0 %v946, 112
  %v1346 = vpop.permute.xlu0 %1345
  %1347 = vrot.lane.b32.xlu0 %v947, 112
  %v1348 = vpop.permute.xlu0 %1347
  %v1349 = vsel %vm810, %v1346, %v1348
  %v1350 = vsel %vm810, %v1344, %v1346
  %v1351 = vsel %vm810, %v1342, %v1344
  %v1352 = vsel %vm810, %v1348, %v1342
  %v1353 = vsel %vm1146, %v1351, -1e+30
  %v1354 = vsel %vm1147, %v1350, -1e+30
  %v1355 = vsel %vm1148, %v1349, -1e+30
  %v1356 = vsel %vm1149, %v1352, -1e+30
  %v1357 = vmax.f32 %v1337, %v1353
  %v1358 = vmax.f32 %v1338, %v1354
  %v1359 = vmax.f32 %v1339, %v1355
  %v1360 = vmax.f32 %v1340, %v1356
  %1361 = vrot.lane.b32.xlu0 %v944, 111
  %v1362 = vpop.permute.xlu0 %1361
  %1363 = vrot.lane.b32.xlu0 %v945, 111
  %v1364 = vpop.permute.xlu0 %1363
  %1365 = vrot.lane.b32.xlu0 %v946, 111
  %v1366 = vpop.permute.xlu0 %1365
  %1367 = vrot.lane.b32.xlu0 %v947, 111
  %v1368 = vpop.permute.xlu0 %1367
  %v1369 = vsel %vm854, %v1366, %v1368
  %v1370 = vsel %vm854, %v1364, %v1366
  %v1371 = vsel %vm854, %v1362, %v1364
  %v1372 = vsel %vm854, %v1368, %v1362
  %v1373 = vsel %vm1176, %v1371, -1e+30
  %v1374 = vsel %vm1177, %v1370, -1e+30
  %v1375 = vsel %vm1178, %v1369, -1e+30
  %v1376 = vsel %vm1179, %v1372, -1e+30
  %v1377 = vmax.f32 %v1357, %v1373
  %v1378 = vmax.f32 %v1358, %v1374
  %v1379 = vmax.f32 %v1359, %v1375
  %v1380 = vmax.f32 %v1360, %v1376
  %v1381 = vadd.f32 %v1377, %v1378
  %v1382 = vadd.f32 %v1381, %v1379
  %v1383 = vadd.f32 %v1382, %v1380
  %1384 = vadd.xlane.f32.xlu0 %v1383
  %v1385 = vpop.xlane.xlu0 %1384
  %v1386 = vmul.f32 %v1377, %v1377
  %v1387 = vmul.f32 %v1378, %v1378
  %v1388 = vmul.f32 %v1379, %v1379
  %v1389 = vmul.f32 %v1380, %v1380
  %v1390 = vadd.f32 %v1386, %v1387
  %v1391 = vadd.f32 %v1390, %v1388
  %v1392 = vadd.f32 %v1391, %v1389
  %1393 = vadd.xlane.f32.xlu0 %v1392
  %v1394 = vpop.xlane.xlu0 %1393
  %v1395 = vmul.f32 %v1385, 0.001953125
  %v1396 = vmul.f32 %v1394, 0.001953125
  %v1397 = vmul.f32 %v1395, %v1395
  %v1398 = vsub.f32 %v1396, %v1397
  %v1399 = vmax.f32 %v1398, 0.0
  %v1400 = vsub.f32 %v1377, %v1395
  %v1401 = vsub.f32 %v1378, %v1395
  %v1402 = vsub.f32 %v1379, %v1395
  %v1403 = vsub.f32 %v1380, %v1395
  %v1404 = vadd.f32 %v1399, 1e-05
  %v1405 = vrsqrt.pop %v1404
  %v1406 = vmul.f32 %v1400, %v1405
  %v1407 = vmul.f32 %v1401, %v1405
  %v1408 = vmul.f32 %v1402, %v1405
  %v1409 = vmul.f32 %v1403, %v1405
  %v1410 = vadd.f32 %v1217, %v1406
  %v1411 = vadd.f32 %v1218, %v1407
  %v1412 = vadd.f32 %v1219, %v1408
  %v1413 = vadd.f32 %v1220, %v1409
  %1414 = vst [vmem:[%s4] sm:$0xff] %v944
  %1415 = vst [vmem:[%s4 + $0x8] sm:$0xff] %v945
  %1416 = vst [vmem:[%s4 + $0x10] sm:$0xff] %v1410
  %1417 = vst [vmem:[%s4 + $0x18] sm:$0xff] %v1411
  %1418 = vst [vmem:[%s4 + $0x20] sm:$0xff] %v946
  %1419 = vst [vmem:[%s4 + $0x28] sm:$0xff] %v947
  %1420 = vst [vmem:[%s4 + $0x30] sm:$0xff] %v1412
  %1421 = vst [vmem:[%s4 + $0x38] sm:$0xff] %v1413
  // Predicated region
  $region18: #{fwd.1} parent=0 // pred_check
    _
  $region19: #{fwd.1} parent=0 // pred_check_branch
    %1423 = sbr.rel (0) target = $region21
  $region20: #{fwd.1} parent=0 // pred_region
    _
  $region21: #{fwd.1} parent=0 // pred_fallthru
    _
  // Predicated region
  $region22: #{fwd.1} parent=0 // pred_check
    _
  $region23: #{fwd.1} parent=0 // pred_check_branch
    %1425 = sbr.rel (0) target = $region25
  $region24: #{fwd.1} parent=0 // pred_region
    _
  $region25: #{fwd.1} parent=0 // pred_fallthru
    _

</llo_original>
